<compile_context>
chip_gen: v5e
topology: v5e:2x2
jax: 0.10.0
libtpu: 0.0.40
codegen_flags: <defaults>
</compile_context>

<pallas_src>
import math

import jax
import jax.numpy as jnp
from jax.experimental import pallas as pl
from jax.experimental.pallas import tpu as pltpu  # noqa: F401  (kept for TPU backend)

# ----- tiny synthetic-BERT config -------------------------------------------
VOCAB = 128
B, S, D = 2, 8, 32          # batch, seq, hidden
NUM_HEADS = 2
HEAD_DIM = D // NUM_HEADS
FFN = 64
NUM_LAYERS = 2
NUM_CLASS = 3               # self.num_class
LANG_CLASS = 4              # self.lang_class
HEAD_PAD = 128              # lane-dense padded width of the fused classifier head
LN_EPS = 1e-12


# ----- in-kernel helpers (pure fns on jnp values, f32 statistics) ------------
def _layernorm(x, g, b):
    mean = jnp.mean(x, axis=-1, keepdims=True)
    var = jnp.mean(jnp.square(x - mean), axis=-1, keepdims=True)
    return (x - mean) * jax.lax.rsqrt(var + LN_EPS) * g + b


def _gelu(x):
    # TODO(synk): PyTorch BERT uses erf-GELU; tanh approximation differs ~1e-3.
    return 0.5 * x * (1.0 + jnp.tanh(0.7978845608028654 * (x + 0.044715 * x * x * x)))


# ----- single fused Pallas kernel --------------------------------------------
def fused_bert_kernel(emb_ref, mask_ref,
                      emb_g_ref, emb_b_ref,
                      wqkv_ref, bqkv_ref, wo_ref, bo_ref,
                      ln1_g_ref, ln1_b_ref,
                      w1_ref, b1_ref, w2_ref, b2_ref,
                      ln2_g_ref, ln2_b_ref,
                      head_w_ref, head_b_ref,
                      out_ref):
    scale = 1.0 / math.sqrt(HEAD_DIM)

    # embeddings LayerNorm (activation slab kept as (B*S, D) f32 in VMEM)
    x = _layernorm(emb_ref[...], emb_g_ref[...], emb_b_ref[...])
    # BERT-style additive mask on the key dimension
    bias_all = (1.0 - mask_ref[...]) * -10000.0                     # (B, S)

    for l in range(NUM_LAYERS):                                     # static unroll
        wqkv = wqkv_ref[l]                                          # (D, 3D) bf16
        bqkv = bqkv_ref[l]                                          # (1, 3D) f32
        wo = wo_ref[l]                                              # (D, D)  bf16
        bo = bo_ref[l]                                              # (1, D)  f32

        # fused Q/K/V projection over the whole (B*S, D) slab
        qkv = jnp.dot(x.astype(jnp.bfloat16), wqkv,
                      preferred_element_type=jnp.float32) + bqkv    # (B*S, 3D) f32
        qkv16 = qkv.astype(jnp.bfloat16)

        attn_rows = []
        for b in range(B):                                          # static unroll
            rows = slice(b * S, (b + 1) * S)
            bias_b = bias_all[b:b + 1, :]                           # (1, S)
            proj = jnp.zeros((S, D), jnp.float32)
            for h in range(NUM_HEADS):                              # static unroll
                qs = slice(h * HEAD_DIM, (h + 1) * HEAD_DIM)
                ks = slice(D + h * HEAD_DIM, D + (h + 1) * HEAD_DIM)
                vs = slice(2 * D + h * HEAD_DIM, 2 * D + (h + 1) * HEAD_DIM)
                qh = qkv16[rows, qs]                                # (S, Hd) bf16
                kh = qkv16[rows, ks]
                vh = qkv16[rows, vs]
                s = (jnp.dot(qh, kh.T, preferred_element_type=jnp.float32)
                     * scale + bias_b)                              # (S, S) f32
                s = s - jnp.max(s, axis=-1, keepdims=True)
                p = jnp.exp(s)
                p = p * pl.reciprocal(jnp.sum(p, axis=-1, keepdims=True),
                                      approx=True)
                ctx = jnp.dot(p.astype(jnp.bfloat16), vh,
                              preferred_element_type=jnp.float32)   # (S, Hd)
                # fold head back through its rows of Wo (no concat over heads)
                proj = proj + jnp.dot(ctx.astype(jnp.bfloat16), wo[qs, :],
                                      preferred_element_type=jnp.float32)
            attn_rows.append(proj)
        attn = jnp.concatenate(attn_rows, axis=0) + bo + x          # + residual
        x = _layernorm(attn, ln1_g_ref[l], ln1_b_ref[l])

        # GELU FFN + residual + LayerNorm
        hmid = jnp.dot(x.astype(jnp.bfloat16), w1_ref[l],
                       preferred_element_type=jnp.float32) + b1_ref[l]
        hmid = _gelu(hmid)
        ffn = (jnp.dot(hmid.astype(jnp.bfloat16), w2_ref[l],
                       preferred_element_type=jnp.float32)
               + b2_ref[l] + x)
        x = _layernorm(ffn, ln2_g_ref[l], ln2_b_ref[l])

    # CLS rows (row b*S of the (B*S, D) slab)
    cls = jnp.concatenate([x[b * S:b * S + 1, :] for b in range(B)], axis=0)
    # TODO(synk): nn.Dropout(p=0.2) is identity in eval mode; omitted here.
    # fused fc + lang_fc head, zero-padded to 128 lanes -> lane-dense store
    out_ref[...] = (jnp.dot(cls.astype(jnp.bfloat16), head_w_ref[...],
                            preferred_element_type=jnp.float32)
                    + head_b_ref[...])                              # (B, 128)


def fused_forward(emb2d, maskf, p):
    # No grid: every operand is a full-array VMEM block; single kernel launch.
    return pl.pallas_call(
        fused_bert_kernel,
        out_shape=jax.ShapeDtypeStruct((B, HEAD_PAD), jnp.float32),
    )(emb2d, maskf,
      p["emb_ln_g"], p["emb_ln_b"],
      p["wqkv"], p["bqkv"], p["wo"], p["bo"],
      p["ln1_g"], p["ln1_b"],
      p["w1"], p["b1"], p["w2"], p["b2"],
      p["ln2_g"], p["ln2_b"],
      p["head_w"], p["head_b"])


# ----- parameter init (deterministic, stands in for from_pretrained) ----------
def init_params(key):
    keys = iter(jax.random.split(key, 128))

    def nrm(shape, scale=0.02):
        return scale * jax.random.normal(next(keys), shape, dtype=jnp.float32)

    params = dict(
        word_emb=nrm((VOCAB, D)),
        pos_emb=nrm((S, D)),
        type_emb=nrm((2, D)),
        emb_ln_g=jnp.ones((1, D), jnp.float32),
        emb_ln_b=jnp.zeros((1, D), jnp.float32),
    )

    wqkv, bqkv, wo, bo = [], [], [], []
    ln1_g, ln1_b, w1, b1, w2, b2, ln2_g, ln2_b = ([] for _ in range(8))
    for _ in range(NUM_LAYERS):
        wqkv.append(jnp.concatenate([nrm((D, D)), nrm((D, D)), nrm((D, D))], axis=1))
        bqkv.append(jnp.zeros((1, 3 * D), jnp.float32))
        wo.append(nrm((D, D)))
        bo.append(jnp.zeros((1, D), jnp.float32))
        ln1_g.append(jnp.ones((1, D), jnp.float32))
        ln1_b.append(jnp.zeros((1, D), jnp.float32))
        w1.append(nrm((D, FFN)))
        b1.append(jnp.zeros((1, FFN), jnp.float32))
        w2.append(nrm((FFN, D)))
        b2.append(jnp.zeros((1, D), jnp.float32))
        ln2_g.append(jnp.ones((1, D), jnp.float32))
        ln2_b.append(jnp.zeros((1, D), jnp.float32))

    # classifier heads: fc (D, NUM_CLASS) + lang_fc (D, LANG_CLASS) merged into
    # one lane-dense (D, 128) weight (zero-padded columns)
    fc_w, fc_b = nrm((D, NUM_CLASS)), jnp.zeros((NUM_CLASS,), jnp.float32)
    lang_w, lang_b = nrm((D, LANG_CLASS)), jnp.zeros((LANG_CLASS,), jnp.float32)
    head_w = jnp.zeros((D, HEAD_PAD), jnp.float32)
    head_w = head_w.at[:, :NUM_CLASS].set(fc_w)
    head_w = head_w.at[:, NUM_CLASS:NUM_CLASS + LANG_CLASS].set(lang_w)
    head_b = jnp.zeros((1, HEAD_PAD), jnp.float32)
    head_b = head_b.at[0, :NUM_CLASS].set(fc_b)
    head_b = head_b.at[0, NUM_CLASS:NUM_CLASS + LANG_CLASS].set(lang_b)

    # matmul weights in bf16 (MXU-native); biases / LN params stay f32
    params.update(
        wqkv=jnp.stack(wqkv).astype(jnp.bfloat16),
        bqkv=jnp.stack(bqkv),
        wo=jnp.stack(wo).astype(jnp.bfloat16),
        bo=jnp.stack(bo),
        ln1_g=jnp.stack(ln1_g), ln1_b=jnp.stack(ln1_b),
        w1=jnp.stack(w1).astype(jnp.bfloat16), b1=jnp.stack(b1),
        w2=jnp.stack(w2).astype(jnp.bfloat16), b2=jnp.stack(b2),
        ln2_g=jnp.stack(ln2_g), ln2_b=jnp.stack(ln2_b),
        head_w=head_w.astype(jnp.bfloat16), head_b=head_b,
    )
    return params


# ----- forward pass (mirrors MyModel_origin.forward) ---------------------------
def model_forward(params, input_ids, attention_mask, token_type_ids=None,
                  lang_id_task=True):
    if token_type_ids is None:
        token_type_ids = jnp.zeros_like(input_ids)

    # Embedding gathers are glue; everything else runs in the fused kernel.
    emb = (params["word_emb"][input_ids]
           + params["pos_emb"][None, :, :]
           + params["type_emb"][token_type_ids])
    emb2d = emb.reshape(B * S, D)
    maskf = attention_mask.astype(jnp.float32)          # (B, S)

    out = fused_forward(emb2d, maskf, params)           # (B, 128) lane-dense
    x = out[:, :NUM_CLASS]
    if lang_id_task:
        lang_logits = out[:, NUM_CLASS:NUM_CLASS + LANG_CLASS]
    else:
        lang_logits = None
    return x, lang_logits


if __name__ == "__main__":
    key = jax.random.PRNGKey(0)
    pkey, dkey = jax.random.split(key)
    params = init_params(pkey)

    input_ids = jax.random.randint(dkey, (B, S), 0, VOCAB, dtype=jnp.int32)
    attention_mask = jnp.ones((B, S), jnp.int32).at[1, 6:].set(0)  # padded tail

    fwd = jax.jit(model_forward, static_argnames=("lang_id_task",))
    logits, lang_logits = fwd(params, input_ids, attention_mask, lang_id_task=True)
    jax.block_until_ready((logits, lang_logits))
    assert logits.shape == (B, NUM_CLASS)
    assert lang_logits.shape == (B, LANG_CLASS)
    print("KERNEL_OK")
</pallas_src>

<mosaic_0001>
module attributes {stable_mosaic.version = 11 : i64} {
  func.func @fused_bert_kernel(%arg0: memref<16x32xf32, #tpu.memory_space<vmem>>, %arg1: memref<2x8xf32, #tpu.memory_space<vmem>>, %arg2: memref<1x32xf32, #tpu.memory_space<vmem>>, %arg3: memref<1x32xf32, #tpu.memory_space<vmem>>, %arg4: memref<2x32x96xbf16, #tpu.memory_space<vmem>>, %arg5: memref<2x1x96xf32, #tpu.memory_space<vmem>>, %arg6: memref<2x32x32xbf16, #tpu.memory_space<vmem>>, %arg7: memref<2x1x32xf32, #tpu.memory_space<vmem>>, %arg8: memref<2x1x32xf32, #tpu.memory_space<vmem>>, %arg9: memref<2x1x32xf32, #tpu.memory_space<vmem>>, %arg10: memref<2x32x64xbf16, #tpu.memory_space<vmem>>, %arg11: memref<2x1x64xf32, #tpu.memory_space<vmem>>, %arg12: memref<2x64x32xbf16, #tpu.memory_space<vmem>>, %arg13: memref<2x1x32xf32, #tpu.memory_space<vmem>>, %arg14: memref<2x1x32xf32, #tpu.memory_space<vmem>>, %arg15: memref<2x1x32xf32, #tpu.memory_space<vmem>>, %arg16: memref<32x128xbf16, #tpu.memory_space<vmem>>, %arg17: memref<1x128xf32, #tpu.memory_space<vmem>>, %arg18: memref<2x128xf32, #tpu.memory_space<vmem>>) attributes {dimension_semantics = [], scalar_prefetch = 0 : i64, scratch_operands = 0 : i64, tpu.core_type = #tpu.core_type<tc>} {
    %c0 = arith.constant 0 : index
    %c0_0 = arith.constant 0 : index
    %0 = vector.load %arg0[%c0, %c0_0] : memref<16x32xf32, #tpu.memory_space<vmem>>, vector<16x32xf32>
    %c0_1 = arith.constant 0 : index
    %c0_2 = arith.constant 0 : index
    %1 = vector.load %arg2[%c0_1, %c0_2] : memref<1x32xf32, #tpu.memory_space<vmem>>, vector<1x32xf32>
    %c0_3 = arith.constant 0 : index
    %c0_4 = arith.constant 0 : index
    %2 = vector.load %arg3[%c0_3, %c0_4] : memref<1x32xf32, #tpu.memory_space<vmem>>, vector<1x32xf32>
    %cst = arith.constant dense<0.000000e+00> : vector<16xf32>
    %3 = vector.multi_reduction <add>, %0, %cst [1] : vector<16x32xf32> to vector<16xf32>
    %4 = vector.shape_cast %3 : vector<16xf32> to vector<16x1xf32>
    %cst_5 = arith.constant 3.200000e+01 : f32
    %5 = vector.broadcast %cst_5 : f32 to vector<16x1xf32>
    %6 = arith.divf %4, %5 : vector<16x1xf32>
    %7 = vector.broadcast %6 : vector<16x1xf32> to vector<16x32xf32>
    %8 = arith.subf %0, %7 : vector<16x32xf32>
    %9 = arith.mulf %8, %8 : vector<16x32xf32>
    %cst_6 = arith.constant dense<0.000000e+00> : vector<16xf32>
    %10 = vector.multi_reduction <add>, %9, %cst_6 [1] : vector<16x32xf32> to vector<16xf32>
    %11 = vector.shape_cast %10 : vector<16xf32> to vector<16x1xf32>
    %cst_7 = arith.constant 3.200000e+01 : f32
    %12 = vector.broadcast %cst_7 : f32 to vector<16x1xf32>
    %13 = arith.divf %11, %12 : vector<16x1xf32>
    %14 = vector.broadcast %6 : vector<16x1xf32> to vector<16x32xf32>
    %15 = arith.subf %0, %14 : vector<16x32xf32>
    %cst_8 = arith.constant 9.99999996E-13 : f32
    %16 = vector.broadcast %cst_8 : f32 to vector<16x1xf32>
    %17 = arith.addf %13, %16 : vector<16x1xf32>
    %18 = math.rsqrt %17 : vector<16x1xf32>
    %19 = vector.broadcast %18 : vector<16x1xf32> to vector<16x32xf32>
    %20 = arith.mulf %15, %19 : vector<16x32xf32>
    %21 = vector.broadcast %1 : vector<1x32xf32> to vector<16x32xf32>
    %22 = arith.mulf %20, %21 : vector<16x32xf32>
    %23 = vector.broadcast %2 : vector<1x32xf32> to vector<16x32xf32>
    %24 = arith.addf %22, %23 : vector<16x32xf32>
    %c0_9 = arith.constant 0 : index
    %c0_10 = arith.constant 0 : index
    %25 = vector.load %arg1[%c0_9, %c0_10] : memref<2x8xf32, #tpu.memory_space<vmem>>, vector<2x8xf32>
    %cst_11 = arith.constant 1.000000e+00 : f32
    %26 = vector.broadcast %cst_11 : f32 to vector<2x8xf32>
    %27 = arith.subf %26, %25 : vector<2x8xf32>
    %cst_12 = arith.constant -1.000000e+04 : f32
    %28 = vector.broadcast %cst_12 : f32 to vector<2x8xf32>
    %29 = arith.mulf %27, %28 : vector<2x8xf32>
    %c0_13 = arith.constant 0 : index
    %c0_14 = arith.constant 0 : index
    %c0_15 = arith.constant 0 : index
    %30 = vector.load %arg4[%c0_13, %c0_14, %c0_15] : memref<2x32x96xbf16, #tpu.memory_space<vmem>>, vector<1x32x96xbf16>
    %31 = vector.shape_cast %30 : vector<1x32x96xbf16> to vector<32x96xbf16>
    %c0_16 = arith.constant 0 : index
    %c0_17 = arith.constant 0 : index
    %c0_18 = arith.constant 0 : index
    %32 = vector.load %arg5[%c0_16, %c0_17, %c0_18] : memref<2x1x96xf32, #tpu.memory_space<vmem>>, vector<1x1x96xf32>
    %33 = vector.shape_cast %32 : vector<1x1x96xf32> to vector<1x96xf32>
    %c0_19 = arith.constant 0 : index
    %c0_20 = arith.constant 0 : index
    %c0_21 = arith.constant 0 : index
    %34 = vector.load %arg6[%c0_19, %c0_20, %c0_21] : memref<2x32x32xbf16, #tpu.memory_space<vmem>>, vector<1x32x32xbf16>
    %35 = vector.shape_cast %34 : vector<1x32x32xbf16> to vector<32x32xbf16>
    %c0_22 = arith.constant 0 : index
    %c0_23 = arith.constant 0 : index
    %c0_24 = arith.constant 0 : index
    %36 = vector.load %arg7[%c0_22, %c0_23, %c0_24] : memref<2x1x32xf32, #tpu.memory_space<vmem>>, vector<1x1x32xf32>
    %37 = vector.shape_cast %36 : vector<1x1x32xf32> to vector<1x32xf32>
    %38 = arith.truncf %24 : vector<16x32xf32> to vector<16x32xbf16>
    %cst_25 = arith.constant dense<0.000000e+00> : vector<16x96xf32>
    %39 = tpu.matmul %38, %31, %cst_25 {dimension_numbers = #tpu.dot_dimension_numbers<[1], [0], [0], [1], [0, 0, 1, 1], [], []>} : vector<16x32xbf16>, vector<32x96xbf16>, vector<16x96xf32> -> vector<16x96xf32>
    %40 = vector.broadcast %33 : vector<1x96xf32> to vector<16x96xf32>
    %41 = arith.addf %39, %40 : vector<16x96xf32>
    %42 = arith.truncf %41 : vector<16x96xf32> to vector<16x96xbf16>
    %43 = vector.extract_strided_slice %29 {offsets = [0, 0], sizes = [1, 8], strides = [1, 1]} : vector<2x8xf32> to vector<1x8xf32>
    %cst_26 = arith.constant 0.000000e+00 : f32
    %44 = vector.broadcast %cst_26 : f32 to vector<8x32xf32>
    %45 = vector.extract_strided_slice %42 {offsets = [0, 0], sizes = [8, 16], strides = [1, 1]} : vector<16x96xbf16> to vector<8x16xbf16>
    %46 = vector.extract_strided_slice %42 {offsets = [0, 32], sizes = [8, 16], strides = [1, 1]} : vector<16x96xbf16> to vector<8x16xbf16>
    %47 = vector.extract_strided_slice %42 {offsets = [0, 64], sizes = [8, 16], strides = [1, 1]} : vector<16x96xbf16> to vector<8x16xbf16>
    %48 = tpu.transpose %46, [1, 0] : vector<8x16xbf16> -> vector<16x8xbf16>
    %cst_27 = arith.constant dense<0.000000e+00> : vector<8x8xf32>
    %49 = tpu.matmul %45, %48, %cst_27 {dimension_numbers = #tpu.dot_dimension_numbers<[1], [0], [0], [1], [0, 0, 1, 1], [], []>} : vector<8x16xbf16>, vector<16x8xbf16>, vector<8x8xf32> -> vector<8x8xf32>
    %cst_28 = arith.constant 2.500000e-01 : f32
    %50 = vector.broadcast %cst_28 : f32 to vector<8x8xf32>
    %51 = arith.mulf %49, %50 : vector<8x8xf32>
    %52 = vector.broadcast %43 : vector<1x8xf32> to vector<8x8xf32>
    %53 = arith.addf %51, %52 : vector<8x8xf32>
    %cst_29 = arith.constant dense<0xFF800000> : vector<8xf32>
    %54 = vector.multi_reduction <maximumf>, %53, %cst_29 [1] : vector<8x8xf32> to vector<8xf32>
    %55 = vector.shape_cast %54 : vector<8xf32> to vector<8x1xf32>
    %56 = vector.broadcast %55 : vector<8x1xf32> to vector<8x8xf32>
    %57 = arith.subf %53, %56 : vector<8x8xf32>
    %58 = math.exp %57 : vector<8x8xf32>
    %cst_30 = arith.constant dense<0.000000e+00> : vector<8xf32>
    %59 = vector.multi_reduction <add>, %58, %cst_30 [1] : vector<8x8xf32> to vector<8xf32>
    %60 = vector.shape_cast %59 : vector<8xf32> to vector<8x1xf32>
    %61 = tpu.reciprocal %60 {approx = true} : vector<8x1xf32> -> vector<8x1xf32>
    %62 = vector.broadcast %61 : vector<8x1xf32> to vector<8x8xf32>
    %63 = arith.mulf %58, %62 : vector<8x8xf32>
    %64 = arith.truncf %63 : vector<8x8xf32> to vector<8x8xbf16>
    %cst_31 = arith.constant dense<0.000000e+00> : vector<8x16xf32>
    %65 = tpu.matmul %64, %47, %cst_31 {dimension_numbers = #tpu.dot_dimension_numbers<[1], [0], [0], [1], [0, 0, 1, 1], [], []>} : vector<8x8xbf16>, vector<8x16xbf16>, vector<8x16xf32> -> vector<8x16xf32>
    %66 = arith.truncf %65 : vector<8x16xf32> to vector<8x16xbf16>
    %67 = vector.extract_strided_slice %35 {offsets = [0, 0], sizes = [16, 32], strides = [1, 1]} : vector<32x32xbf16> to vector<16x32xbf16>
    %cst_32 = arith.constant dense<0.000000e+00> : vector<8x32xf32>
    %68 = tpu.matmul %66, %67, %cst_32 {dimension_numbers = #tpu.dot_dimension_numbers<[1], [0], [0], [1], [0, 0, 1, 1], [], []>} : vector<8x16xbf16>, vector<16x32xbf16>, vector<8x32xf32> -> vector<8x32xf32>
    %69 = arith.addf %44, %68 : vector<8x32xf32>
    %70 = vector.extract_strided_slice %42 {offsets = [0, 16], sizes = [8, 16], strides = [1, 1]} : vector<16x96xbf16> to vector<8x16xbf16>
    %71 = vector.extract_strided_slice %42 {offsets = [0, 48], sizes = [8, 16], strides = [1, 1]} : vector<16x96xbf16> to vector<8x16xbf16>
    %72 = vector.extract_strided_slice %42 {offsets = [0, 80], sizes = [8, 16], strides = [1, 1]} : vector<16x96xbf16> to vector<8x16xbf16>
    %73 = tpu.transpose %71, [1, 0] : vector<8x16xbf16> -> vector<16x8xbf16>
    %cst_33 = arith.constant dense<0.000000e+00> : vector<8x8xf32>
    %74 = tpu.matmul %70, %73, %cst_33 {dimension_numbers = #tpu.dot_dimension_numbers<[1], [0], [0], [1], [0, 0, 1, 1], [], []>} : vector<8x16xbf16>, vector<16x8xbf16>, vector<8x8xf32> -> vector<8x8xf32>
    %cst_34 = arith.constant 2.500000e-01 : f32
    %75 = vector.broadcast %cst_34 : f32 to vector<8x8xf32>
    %76 = arith.mulf %74, %75 : vector<8x8xf32>
    %77 = vector.broadcast %43 : vector<1x8xf32> to vector<8x8xf32>
    %78 = arith.addf %76, %77 : vector<8x8xf32>
    %cst_35 = arith.constant dense<0xFF800000> : vector<8xf32>
    %79 = vector.multi_reduction <maximumf>, %78, %cst_35 [1] : vector<8x8xf32> to vector<8xf32>
    %80 = vector.shape_cast %79 : vector<8xf32> to vector<8x1xf32>
    %81 = vector.broadcast %80 : vector<8x1xf32> to vector<8x8xf32>
    %82 = arith.subf %78, %81 : vector<8x8xf32>
    %83 = math.exp %82 : vector<8x8xf32>
    %cst_36 = arith.constant dense<0.000000e+00> : vector<8xf32>
    %84 = vector.multi_reduction <add>, %83, %cst_36 [1] : vector<8x8xf32> to vector<8xf32>
    %85 = vector.shape_cast %84 : vector<8xf32> to vector<8x1xf32>
    %86 = tpu.reciprocal %85 {approx = true} : vector<8x1xf32> -> vector<8x1xf32>
    %87 = vector.broadcast %86 : vector<8x1xf32> to vector<8x8xf32>
    %88 = arith.mulf %83, %87 : vector<8x8xf32>
    %89 = arith.truncf %88 : vector<8x8xf32> to vector<8x8xbf16>
    %cst_37 = arith.constant dense<0.000000e+00> : vector<8x16xf32>
    %90 = tpu.matmul %89, %72, %cst_37 {dimension_numbers = #tpu.dot_dimension_numbers<[1], [0], [0], [1], [0, 0, 1, 1], [], []>} : vector<8x8xbf16>, vector<8x16xbf16>, vector<8x16xf32> -> vector<8x16xf32>
    %91 = arith.truncf %90 : vector<8x16xf32> to vector<8x16xbf16>
    %92 = vector.extract_strided_slice %35 {offsets = [16, 0], sizes = [16, 32], strides = [1, 1]} : vector<32x32xbf16> to vector<16x32xbf16>
    %cst_38 = arith.constant dense<0.000000e+00> : vector<8x32xf32>
    %93 = tpu.matmul %91, %92, %cst_38 {dimension_numbers = #tpu.dot_dimension_numbers<[1], [0], [0], [1], [0, 0, 1, 1], [], []>} : vector<8x16xbf16>, vector<16x32xbf16>, vector<8x32xf32> -> vector<8x32xf32>
    %94 = arith.addf %69, %93 : vector<8x32xf32>
    %95 = vector.extract_strided_slice %29 {offsets = [1, 0], sizes = [1, 8], strides = [1, 1]} : vector<2x8xf32> to vector<1x8xf32>
    %cst_39 = arith.constant 0.000000e+00 : f32
    %96 = vector.broadcast %cst_39 : f32 to vector<8x32xf32>
    %97 = vector.extract_strided_slice %42 {offsets = [8, 0], sizes = [8, 16], strides = [1, 1]} : vector<16x96xbf16> to vector<8x16xbf16>
    %98 = vector.extract_strided_slice %42 {offsets = [8, 32], sizes = [8, 16], strides = [1, 1]} : vector<16x96xbf16> to vector<8x16xbf16>
    %99 = vector.extract_strided_slice %42 {offsets = [8, 64], sizes = [8, 16], strides = [1, 1]} : vector<16x96xbf16> to vector<8x16xbf16>
    %100 = tpu.transpose %98, [1, 0] : vector<8x16xbf16> -> vector<16x8xbf16>
    %cst_40 = arith.constant dense<0.000000e+00> : vector<8x8xf32>
    %101 = tpu.matmul %97, %100, %cst_40 {dimension_numbers = #tpu.dot_dimension_numbers<[1], [0], [0], [1], [0, 0, 1, 1], [], []>} : vector<8x16xbf16>, vector<16x8xbf16>, vector<8x8xf32> -> vector<8x8xf32>
    %cst_41 = arith.constant 2.500000e-01 : f32
    %102 = vector.broadcast %cst_41 : f32 to vector<8x8xf32>
    %103 = arith.mulf %101, %102 : vector<8x8xf32>
    %104 = vector.broadcast %95 : vector<1x8xf32> to vector<8x8xf32>
    %105 = arith.addf %103, %104 : vector<8x8xf32>
    %cst_42 = arith.constant dense<0xFF800000> : vector<8xf32>
    %106 = vector.multi_reduction <maximumf>, %105, %cst_42 [1] : vector<8x8xf32> to vector<8xf32>
    %107 = vector.shape_cast %106 : vector<8xf32> to vector<8x1xf32>
    %108 = vector.broadcast %107 : vector<8x1xf32> to vector<8x8xf32>
    %109 = arith.subf %105, %108 : vector<8x8xf32>
    %110 = math.exp %109 : vector<8x8xf32>
    %cst_43 = arith.constant dense<0.000000e+00> : vector<8xf32>
    %111 = vector.multi_reduction <add>, %110, %cst_43 [1] : vector<8x8xf32> to vector<8xf32>
    %112 = vector.shape_cast %111 : vector<8xf32> to vector<8x1xf32>
    %113 = tpu.reciprocal %112 {approx = true} : vector<8x1xf32> -> vector<8x1xf32>
    %114 = vector.broadcast %113 : vector<8x1xf32> to vector<8x8xf32>
    %115 = arith.mulf %110, %114 : vector<8x8xf32>
    %116 = arith.truncf %115 : vector<8x8xf32> to vector<8x8xbf16>
    %cst_44 = arith.constant dense<0.000000e+00> : vector<8x16xf32>
    %117 = tpu.matmul %116, %99, %cst_44 {dimension_numbers = #tpu.dot_dimension_numbers<[1], [0], [0], [1], [0, 0, 1, 1], [], []>} : vector<8x8xbf16>, vector<8x16xbf16>, vector<8x16xf32> -> vector<8x16xf32>
    %118 = arith.truncf %117 : vector<8x16xf32> to vector<8x16xbf16>
    %119 = vector.extract_strided_slice %35 {offsets = [0, 0], sizes = [16, 32], strides = [1, 1]} : vector<32x32xbf16> to vector<16x32xbf16>
    %cst_45 = arith.constant dense<0.000000e+00> : vector<8x32xf32>
    %120 = tpu.matmul %118, %119, %cst_45 {dimension_numbers = #tpu.dot_dimension_numbers<[1], [0], [0], [1], [0, 0, 1, 1], [], []>} : vector<8x16xbf16>, vector<16x32xbf16>, vector<8x32xf32> -> vector<8x32xf32>
    %121 = arith.addf %96, %120 : vector<8x32xf32>
    %122 = vector.extract_strided_slice %42 {offsets = [8, 16], sizes = [8, 16], strides = [1, 1]} : vector<16x96xbf16> to vector<8x16xbf16>
    %123 = vector.extract_strided_slice %42 {offsets = [8, 48], sizes = [8, 16], strides = [1, 1]} : vector<16x96xbf16> to vector<8x16xbf16>
    %124 = vector.extract_strided_slice %42 {offsets = [8, 80], sizes = [8, 16], strides = [1, 1]} : vector<16x96xbf16> to vector<8x16xbf16>
    %125 = tpu.transpose %123, [1, 0] : vector<8x16xbf16> -> vector<16x8xbf16>
    %cst_46 = arith.constant dense<0.000000e+00> : vector<8x8xf32>
    %126 = tpu.matmul %122, %125, %cst_46 {dimension_numbers = #tpu.dot_dimension_numbers<[1], [0], [0], [1], [0, 0, 1, 1], [], []>} : vector<8x16xbf16>, vector<16x8xbf16>, vector<8x8xf32> -> vector<8x8xf32>
    %cst_47 = arith.constant 2.500000e-01 : f32
    %127 = vector.broadcast %cst_47 : f32 to vector<8x8xf32>
    %128 = arith.mulf %126, %127 : vector<8x8xf32>
    %129 = vector.broadcast %95 : vector<1x8xf32> to vector<8x8xf32>
    %130 = arith.addf %128, %129 : vector<8x8xf32>
    %cst_48 = arith.constant dense<0xFF800000> : vector<8xf32>
    %131 = vector.multi_reduction <maximumf>, %130, %cst_48 [1] : vector<8x8xf32> to vector<8xf32>
    %132 = vector.shape_cast %131 : vector<8xf32> to vector<8x1xf32>
    %133 = vector.broadcast %132 : vector<8x1xf32> to vector<8x8xf32>
    %134 = arith.subf %130, %133 : vector<8x8xf32>
    %135 = math.exp %134 : vector<8x8xf32>
    %cst_49 = arith.constant dense<0.000000e+00> : vector<8xf32>
    %136 = vector.multi_reduction <add>, %135, %cst_49 [1] : vector<8x8xf32> to vector<8xf32>
    %137 = vector.shape_cast %136 : vector<8xf32> to vector<8x1xf32>
    %138 = tpu.reciprocal %137 {approx = true} : vector<8x1xf32> -> vector<8x1xf32>
    %139 = vector.broadcast %138 : vector<8x1xf32> to vector<8x8xf32>
    %140 = arith.mulf %135, %139 : vector<8x8xf32>
    %141 = arith.truncf %140 : vector<8x8xf32> to vector<8x8xbf16>
    %cst_50 = arith.constant dense<0.000000e+00> : vector<8x16xf32>
    %142 = tpu.matmul %141, %124, %cst_50 {dimension_numbers = #tpu.dot_dimension_numbers<[1], [0], [0], [1], [0, 0, 1, 1], [], []>} : vector<8x8xbf16>, vector<8x16xbf16>, vector<8x16xf32> -> vector<8x16xf32>
    %143 = arith.truncf %142 : vector<8x16xf32> to vector<8x16xbf16>
    %144 = vector.extract_strided_slice %35 {offsets = [16, 0], sizes = [16, 32], strides = [1, 1]} : vector<32x32xbf16> to vector<16x32xbf16>
    %cst_51 = arith.constant dense<0.000000e+00> : vector<8x32xf32>
    %145 = tpu.matmul %143, %144, %cst_51 {dimension_numbers = #tpu.dot_dimension_numbers<[1], [0], [0], [1], [0, 0, 1, 1], [], []>} : vector<8x16xbf16>, vector<16x32xbf16>, vector<8x32xf32> -> vector<8x32xf32>
    %146 = arith.addf %121, %145 : vector<8x32xf32>
    %147 = tpu.concatenate %94, %146 in 0 : vector<8x32xf32>, vector<8x32xf32> -> vector<16x32xf32>
    %148 = vector.broadcast %37 : vector<1x32xf32> to vector<16x32xf32>
    %149 = arith.addf %147, %148 : vector<16x32xf32>
    %150 = arith.addf %149, %24 : vector<16x32xf32>
    %c0_52 = arith.constant 0 : index
    %c0_53 = arith.constant 0 : index
    %c0_54 = arith.constant 0 : index
    %151 = vector.load %arg8[%c0_52, %c0_53, %c0_54] : memref<2x1x32xf32, #tpu.memory_space<vmem>>, vector<1x1x32xf32>
    %152 = vector.shape_cast %151 : vector<1x1x32xf32> to vector<1x32xf32>
    %c0_55 = arith.constant 0 : index
    %c0_56 = arith.constant 0 : index
    %c0_57 = arith.constant 0 : index
    %153 = vector.load %arg9[%c0_55, %c0_56, %c0_57] : memref<2x1x32xf32, #tpu.memory_space<vmem>>, vector<1x1x32xf32>
    %154 = vector.shape_cast %153 : vector<1x1x32xf32> to vector<1x32xf32>
    %cst_58 = arith.constant dense<0.000000e+00> : vector<16xf32>
    %155 = vector.multi_reduction <add>, %150, %cst_58 [1] : vector<16x32xf32> to vector<16xf32>
    %156 = vector.shape_cast %155 : vector<16xf32> to vector<16x1xf32>
    %cst_59 = arith.constant 3.200000e+01 : f32
    %157 = vector.broadcast %cst_59 : f32 to vector<16x1xf32>
    %158 = arith.divf %156, %157 : vector<16x1xf32>
    %159 = vector.broadcast %158 : vector<16x1xf32> to vector<16x32xf32>
    %160 = arith.subf %150, %159 : vector<16x32xf32>
    %161 = arith.mulf %160, %160 : vector<16x32xf32>
    %cst_60 = arith.constant dense<0.000000e+00> : vector<16xf32>
    %162 = vector.multi_reduction <add>, %161, %cst_60 [1] : vector<16x32xf32> to vector<16xf32>
    %163 = vector.shape_cast %162 : vector<16xf32> to vector<16x1xf32>
    %cst_61 = arith.constant 3.200000e+01 : f32
    %164 = vector.broadcast %cst_61 : f32 to vector<16x1xf32>
    %165 = arith.divf %163, %164 : vector<16x1xf32>
    %166 = vector.broadcast %158 : vector<16x1xf32> to vector<16x32xf32>
    %167 = arith.subf %150, %166 : vector<16x32xf32>
    %cst_62 = arith.constant 9.99999996E-13 : f32
    %168 = vector.broadcast %cst_62 : f32 to vector<16x1xf32>
    %169 = arith.addf %165, %168 : vector<16x1xf32>
    %170 = math.rsqrt %169 : vector<16x1xf32>
    %171 = vector.broadcast %170 : vector<16x1xf32> to vector<16x32xf32>
    %172 = arith.mulf %167, %171 : vector<16x32xf32>
    %173 = vector.broadcast %152 : vector<1x32xf32> to vector<16x32xf32>
    %174 = arith.mulf %172, %173 : vector<16x32xf32>
    %175 = vector.broadcast %154 : vector<1x32xf32> to vector<16x32xf32>
    %176 = arith.addf %174, %175 : vector<16x32xf32>
    %177 = arith.truncf %176 : vector<16x32xf32> to vector<16x32xbf16>
    %c0_63 = arith.constant 0 : index
    %c0_64 = arith.constant 0 : index
    %c0_65 = arith.constant 0 : index
    %178 = vector.load %arg10[%c0_63, %c0_64, %c0_65] : memref<2x32x64xbf16, #tpu.memory_space<vmem>>, vector<1x32x64xbf16>
    %179 = vector.shape_cast %178 : vector<1x32x64xbf16> to vector<32x64xbf16>
    %cst_66 = arith.constant dense<0.000000e+00> : vector<16x64xf32>
    %180 = tpu.matmul %177, %179, %cst_66 {dimension_numbers = #tpu.dot_dimension_numbers<[1], [0], [0], [1], [0, 0, 1, 1], [], []>} : vector<16x32xbf16>, vector<32x64xbf16>, vector<16x64xf32> -> vector<16x64xf32>
    %c0_67 = arith.constant 0 : index
    %c0_68 = arith.constant 0 : index
    %c0_69 = arith.constant 0 : index
    %181 = vector.load %arg11[%c0_67, %c0_68, %c0_69] : memref<2x1x64xf32, #tpu.memory_space<vmem>>, vector<1x1x64xf32>
    %182 = vector.shape_cast %181 : vector<1x1x64xf32> to vector<1x64xf32>
    %183 = vector.broadcast %182 : vector<1x64xf32> to vector<16x64xf32>
    %184 = arith.addf %180, %183 : vector<16x64xf32>
    %cst_70 = arith.constant 5.000000e-01 : f32
    %185 = vector.broadcast %cst_70 : f32 to vector<16x64xf32>
    %186 = arith.mulf %185, %184 : vector<16x64xf32>
    %cst_71 = arith.constant 4.471500e-02 : f32
    %187 = vector.broadcast %cst_71 : f32 to vector<16x64xf32>
    %188 = arith.mulf %187, %184 : vector<16x64xf32>
    %189 = arith.mulf %188, %184 : vector<16x64xf32>
    %190 = arith.mulf %189, %184 : vector<16x64xf32>
    %191 = arith.addf %184, %190 : vector<16x64xf32>
    %cst_72 = arith.constant 0.797884583 : f32
    %192 = vector.broadcast %cst_72 : f32 to vector<16x64xf32>
    %193 = arith.mulf %192, %191 : vector<16x64xf32>
    %194 = math.tanh %193 : vector<16x64xf32>
    %cst_73 = arith.constant 1.000000e+00 : f32
    %195 = vector.broadcast %cst_73 : f32 to vector<16x64xf32>
    %196 = arith.addf %195, %194 : vector<16x64xf32>
    %197 = arith.mulf %186, %196 : vector<16x64xf32>
    %198 = arith.truncf %197 : vector<16x64xf32> to vector<16x64xbf16>
    %c0_74 = arith.constant 0 : index
    %c0_75 = arith.constant 0 : index
    %c0_76 = arith.constant 0 : index
    %199 = vector.load %arg12[%c0_74, %c0_75, %c0_76] : memref<2x64x32xbf16, #tpu.memory_space<vmem>>, vector<1x64x32xbf16>
    %200 = vector.shape_cast %199 : vector<1x64x32xbf16> to vector<64x32xbf16>
    %cst_77 = arith.constant dense<0.000000e+00> : vector<16x32xf32>
    %201 = tpu.matmul %198, %200, %cst_77 {dimension_numbers = #tpu.dot_dimension_numbers<[1], [0], [0], [1], [0, 0, 1, 1], [], []>} : vector<16x64xbf16>, vector<64x32xbf16>, vector<16x32xf32> -> vector<16x32xf32>
    %c0_78 = arith.constant 0 : index
    %c0_79 = arith.constant 0 : index
    %c0_80 = arith.constant 0 : index
    %202 = vector.load %arg13[%c0_78, %c0_79, %c0_80] : memref<2x1x32xf32, #tpu.memory_space<vmem>>, vector<1x1x32xf32>
    %203 = vector.shape_cast %202 : vector<1x1x32xf32> to vector<1x32xf32>
    %204 = vector.broadcast %203 : vector<1x32xf32> to vector<16x32xf32>
    %205 = arith.addf %201, %204 : vector<16x32xf32>
    %206 = arith.addf %205, %176 : vector<16x32xf32>
    %c0_81 = arith.constant 0 : index
    %c0_82 = arith.constant 0 : index
    %c0_83 = arith.constant 0 : index
    %207 = vector.load %arg14[%c0_81, %c0_82, %c0_83] : memref<2x1x32xf32, #tpu.memory_space<vmem>>, vector<1x1x32xf32>
    %208 = vector.shape_cast %207 : vector<1x1x32xf32> to vector<1x32xf32>
    %c0_84 = arith.constant 0 : index
    %c0_85 = arith.constant 0 : index
    %c0_86 = arith.constant 0 : index
    %209 = vector.load %arg15[%c0_84, %c0_85, %c0_86] : memref<2x1x32xf32, #tpu.memory_space<vmem>>, vector<1x1x32xf32>
    %210 = vector.shape_cast %209 : vector<1x1x32xf32> to vector<1x32xf32>
    %cst_87 = arith.constant dense<0.000000e+00> : vector<16xf32>
    %211 = vector.multi_reduction <add>, %206, %cst_87 [1] : vector<16x32xf32> to vector<16xf32>
    %212 = vector.shape_cast %211 : vector<16xf32> to vector<16x1xf32>
    %cst_88 = arith.constant 3.200000e+01 : f32
    %213 = vector.broadcast %cst_88 : f32 to vector<16x1xf32>
    %214 = arith.divf %212, %213 : vector<16x1xf32>
    %215 = vector.broadcast %214 : vector<16x1xf32> to vector<16x32xf32>
    %216 = arith.subf %206, %215 : vector<16x32xf32>
    %217 = arith.mulf %216, %216 : vector<16x32xf32>
    %cst_89 = arith.constant dense<0.000000e+00> : vector<16xf32>
    %218 = vector.multi_reduction <add>, %217, %cst_89 [1] : vector<16x32xf32> to vector<16xf32>
    %219 = vector.shape_cast %218 : vector<16xf32> to vector<16x1xf32>
    %cst_90 = arith.constant 3.200000e+01 : f32
    %220 = vector.broadcast %cst_90 : f32 to vector<16x1xf32>
    %221 = arith.divf %219, %220 : vector<16x1xf32>
    %222 = vector.broadcast %214 : vector<16x1xf32> to vector<16x32xf32>
    %223 = arith.subf %206, %222 : vector<16x32xf32>
    %cst_91 = arith.constant 9.99999996E-13 : f32
    %224 = vector.broadcast %cst_91 : f32 to vector<16x1xf32>
    %225 = arith.addf %221, %224 : vector<16x1xf32>
    %226 = math.rsqrt %225 : vector<16x1xf32>
    %227 = vector.broadcast %226 : vector<16x1xf32> to vector<16x32xf32>
    %228 = arith.mulf %223, %227 : vector<16x32xf32>
    %229 = vector.broadcast %208 : vector<1x32xf32> to vector<16x32xf32>
    %230 = arith.mulf %228, %229 : vector<16x32xf32>
    %231 = vector.broadcast %210 : vector<1x32xf32> to vector<16x32xf32>
    %232 = arith.addf %230, %231 : vector<16x32xf32>
    %c1 = arith.constant 1 : index
    %c0_92 = arith.constant 0 : index
    %c0_93 = arith.constant 0 : index
    %233 = vector.load %arg4[%c1, %c0_92, %c0_93] : memref<2x32x96xbf16, #tpu.memory_space<vmem>>, vector<1x32x96xbf16>
    %234 = vector.shape_cast %233 : vector<1x32x96xbf16> to vector<32x96xbf16>
    %c1_94 = arith.constant 1 : index
    %c0_95 = arith.constant 0 : index
    %c0_96 = arith.constant 0 : index
    %235 = vector.load %arg5[%c1_94, %c0_95, %c0_96] : memref<2x1x96xf32, #tpu.memory_space<vmem>>, vector<1x1x96xf32>
    %236 = vector.shape_cast %235 : vector<1x1x96xf32> to vector<1x96xf32>
    %c1_97 = arith.constant 1 : index
    %c0_98 = arith.constant 0 : index
    %c0_99 = arith.constant 0 : index
    %237 = vector.load %arg6[%c1_97, %c0_98, %c0_99] : memref<2x32x32xbf16, #tpu.memory_space<vmem>>, vector<1x32x32xbf16>
    %238 = vector.shape_cast %237 : vector<1x32x32xbf16> to vector<32x32xbf16>
    %c1_100 = arith.constant 1 : index
    %c0_101 = arith.constant 0 : index
    %c0_102 = arith.constant 0 : index
    %239 = vector.load %arg7[%c1_100, %c0_101, %c0_102] : memref<2x1x32xf32, #tpu.memory_space<vmem>>, vector<1x1x32xf32>
    %240 = vector.shape_cast %239 : vector<1x1x32xf32> to vector<1x32xf32>
    %241 = arith.truncf %232 : vector<16x32xf32> to vector<16x32xbf16>
    %cst_103 = arith.constant dense<0.000000e+00> : vector<16x96xf32>
    %242 = tpu.matmul %241, %234, %cst_103 {dimension_numbers = #tpu.dot_dimension_numbers<[1], [0], [0], [1], [0, 0, 1, 1], [], []>} : vector<16x32xbf16>, vector<32x96xbf16>, vector<16x96xf32> -> vector<16x96xf32>
    %243 = vector.broadcast %236 : vector<1x96xf32> to vector<16x96xf32>
    %244 = arith.addf %242, %243 : vector<16x96xf32>
    %245 = arith.truncf %244 : vector<16x96xf32> to vector<16x96xbf16>
    %246 = vector.extract_strided_slice %29 {offsets = [0, 0], sizes = [1, 8], strides = [1, 1]} : vector<2x8xf32> to vector<1x8xf32>
    %cst_104 = arith.constant 0.000000e+00 : f32
    %247 = vector.broadcast %cst_104 : f32 to vector<8x32xf32>
    %248 = vector.extract_strided_slice %245 {offsets = [0, 0], sizes = [8, 16], strides = [1, 1]} : vector<16x96xbf16> to vector<8x16xbf16>
    %249 = vector.extract_strided_slice %245 {offsets = [0, 32], sizes = [8, 16], strides = [1, 1]} : vector<16x96xbf16> to vector<8x16xbf16>
    %250 = vector.extract_strided_slice %245 {offsets = [0, 64], sizes = [8, 16], strides = [1, 1]} : vector<16x96xbf16> to vector<8x16xbf16>
    %251 = tpu.transpose %249, [1, 0] : vector<8x16xbf16> -> vector<16x8xbf16>
    %cst_105 = arith.constant dense<0.000000e+00> : vector<8x8xf32>
    %252 = tpu.matmul %248, %251, %cst_105 {dimension_numbers = #tpu.dot_dimension_numbers<[1], [0], [0], [1], [0, 0, 1, 1], [], []>} : vector<8x16xbf16>, vector<16x8xbf16>, vector<8x8xf32> -> vector<8x8xf32>
    %cst_106 = arith.constant 2.500000e-01 : f32
    %253 = vector.broadcast %cst_106 : f32 to vector<8x8xf32>
    %254 = arith.mulf %252, %253 : vector<8x8xf32>
    %255 = vector.broadcast %246 : vector<1x8xf32> to vector<8x8xf32>
    %256 = arith.addf %254, %255 : vector<8x8xf32>
    %cst_107 = arith.constant dense<0xFF800000> : vector<8xf32>
    %257 = vector.multi_reduction <maximumf>, %256, %cst_107 [1] : vector<8x8xf32> to vector<8xf32>
    %258 = vector.shape_cast %257 : vector<8xf32> to vector<8x1xf32>
    %259 = vector.broadcast %258 : vector<8x1xf32> to vector<8x8xf32>
    %260 = arith.subf %256, %259 : vector<8x8xf32>
    %261 = math.exp %260 : vector<8x8xf32>
    %cst_108 = arith.constant dense<0.000000e+00> : vector<8xf32>
    %262 = vector.multi_reduction <add>, %261, %cst_108 [1] : vector<8x8xf32> to vector<8xf32>
    %263 = vector.shape_cast %262 : vector<8xf32> to vector<8x1xf32>
    %264 = tpu.reciprocal %263 {approx = true} : vector<8x1xf32> -> vector<8x1xf32>
    %265 = vector.broadcast %264 : vector<8x1xf32> to vector<8x8xf32>
    %266 = arith.mulf %261, %265 : vector<8x8xf32>
    %267 = arith.truncf %266 : vector<8x8xf32> to vector<8x8xbf16>
    %cst_109 = arith.constant dense<0.000000e+00> : vector<8x16xf32>
    %268 = tpu.matmul %267, %250, %cst_109 {dimension_numbers = #tpu.dot_dimension_numbers<[1], [0], [0], [1], [0, 0, 1, 1], [], []>} : vector<8x8xbf16>, vector<8x16xbf16>, vector<8x16xf32> -> vector<8x16xf32>
    %269 = arith.truncf %268 : vector<8x16xf32> to vector<8x16xbf16>
    %270 = vector.extract_strided_slice %238 {offsets = [0, 0], sizes = [16, 32], strides = [1, 1]} : vector<32x32xbf16> to vector<16x32xbf16>
    %cst_110 = arith.constant dense<0.000000e+00> : vector<8x32xf32>
    %271 = tpu.matmul %269, %270, %cst_110 {dimension_numbers = #tpu.dot_dimension_numbers<[1], [0], [0], [1], [0, 0, 1, 1], [], []>} : vector<8x16xbf16>, vector<16x32xbf16>, vector<8x32xf32> -> vector<8x32xf32>
    %272 = arith.addf %247, %271 : vector<8x32xf32>
    %273 = vector.extract_strided_slice %245 {offsets = [0, 16], sizes = [8, 16], strides = [1, 1]} : vector<16x96xbf16> to vector<8x16xbf16>
    %274 = vector.extract_strided_slice %245 {offsets = [0, 48], sizes = [8, 16], strides = [1, 1]} : vector<16x96xbf16> to vector<8x16xbf16>
    %275 = vector.extract_strided_slice %245 {offsets = [0, 80], sizes = [8, 16], strides = [1, 1]} : vector<16x96xbf16> to vector<8x16xbf16>
    %276 = tpu.transpose %274, [1, 0] : vector<8x16xbf16> -> vector<16x8xbf16>
    %cst_111 = arith.constant dense<0.000000e+00> : vector<8x8xf32>
    %277 = tpu.matmul %273, %276, %cst_111 {dimension_numbers = #tpu.dot_dimension_numbers<[1], [0], [0], [1], [0, 0, 1, 1], [], []>} : vector<8x16xbf16>, vector<16x8xbf16>, vector<8x8xf32> -> vector<8x8xf32>
    %cst_112 = arith.constant 2.500000e-01 : f32
    %278 = vector.broadcast %cst_112 : f32 to vector<8x8xf32>
    %279 = arith.mulf %277, %278 : vector<8x8xf32>
    %280 = vector.broadcast %246 : vector<1x8xf32> to vector<8x8xf32>
    %281 = arith.addf %279, %280 : vector<8x8xf32>
    %cst_113 = arith.constant dense<0xFF800000> : vector<8xf32>
    %282 = vector.multi_reduction <maximumf>, %281, %cst_113 [1] : vector<8x8xf32> to vector<8xf32>
    %283 = vector.shape_cast %282 : vector<8xf32> to vector<8x1xf32>
    %284 = vector.broadcast %283 : vector<8x1xf32> to vector<8x8xf32>
    %285 = arith.subf %281, %284 : vector<8x8xf32>
    %286 = math.exp %285 : vector<8x8xf32>
    %cst_114 = arith.constant dense<0.000000e+00> : vector<8xf32>
    %287 = vector.multi_reduction <add>, %286, %cst_114 [1] : vector<8x8xf32> to vector<8xf32>
    %288 = vector.shape_cast %287 : vector<8xf32> to vector<8x1xf32>
    %289 = tpu.reciprocal %288 {approx = true} : vector<8x1xf32> -> vector<8x1xf32>
    %290 = vector.broadcast %289 : vector<8x1xf32> to vector<8x8xf32>
    %291 = arith.mulf %286, %290 : vector<8x8xf32>
    %292 = arith.truncf %291 : vector<8x8xf32> to vector<8x8xbf16>
    %cst_115 = arith.constant dense<0.000000e+00> : vector<8x16xf32>
    %293 = tpu.matmul %292, %275, %cst_115 {dimension_numbers = #tpu.dot_dimension_numbers<[1], [0], [0], [1], [0, 0, 1, 1], [], []>} : vector<8x8xbf16>, vector<8x16xbf16>, vector<8x16xf32> -> vector<8x16xf32>
    %294 = arith.truncf %293 : vector<8x16xf32> to vector<8x16xbf16>
    %295 = vector.extract_strided_slice %238 {offsets = [16, 0], sizes = [16, 32], strides = [1, 1]} : vector<32x32xbf16> to vector<16x32xbf16>
    %cst_116 = arith.constant dense<0.000000e+00> : vector<8x32xf32>
    %296 = tpu.matmul %294, %295, %cst_116 {dimension_numbers = #tpu.dot_dimension_numbers<[1], [0], [0], [1], [0, 0, 1, 1], [], []>} : vector<8x16xbf16>, vector<16x32xbf16>, vector<8x32xf32> -> vector<8x32xf32>
    %297 = arith.addf %272, %296 : vector<8x32xf32>
    %298 = vector.extract_strided_slice %29 {offsets = [1, 0], sizes = [1, 8], strides = [1, 1]} : vector<2x8xf32> to vector<1x8xf32>
    %cst_117 = arith.constant 0.000000e+00 : f32
    %299 = vector.broadcast %cst_117 : f32 to vector<8x32xf32>
    %300 = vector.extract_strided_slice %245 {offsets = [8, 0], sizes = [8, 16], strides = [1, 1]} : vector<16x96xbf16> to vector<8x16xbf16>
    %301 = vector.extract_strided_slice %245 {offsets = [8, 32], sizes = [8, 16], strides = [1, 1]} : vector<16x96xbf16> to vector<8x16xbf16>
    %302 = vector.extract_strided_slice %245 {offsets = [8, 64], sizes = [8, 16], strides = [1, 1]} : vector<16x96xbf16> to vector<8x16xbf16>
    %303 = tpu.transpose %301, [1, 0] : vector<8x16xbf16> -> vector<16x8xbf16>
    %cst_118 = arith.constant dense<0.000000e+00> : vector<8x8xf32>
    %304 = tpu.matmul %300, %303, %cst_118 {dimension_numbers = #tpu.dot_dimension_numbers<[1], [0], [0], [1], [0, 0, 1, 1], [], []>} : vector<8x16xbf16>, vector<16x8xbf16>, vector<8x8xf32> -> vector<8x8xf32>
    %cst_119 = arith.constant 2.500000e-01 : f32
    %305 = vector.broadcast %cst_119 : f32 to vector<8x8xf32>
    %306 = arith.mulf %304, %305 : vector<8x8xf32>
    %307 = vector.broadcast %298 : vector<1x8xf32> to vector<8x8xf32>
    %308 = arith.addf %306, %307 : vector<8x8xf32>
    %cst_120 = arith.constant dense<0xFF800000> : vector<8xf32>
    %309 = vector.multi_reduction <maximumf>, %308, %cst_120 [1] : vector<8x8xf32> to vector<8xf32>
    %310 = vector.shape_cast %309 : vector<8xf32> to vector<8x1xf32>
    %311 = vector.broadcast %310 : vector<8x1xf32> to vector<8x8xf32>
    %312 = arith.subf %308, %311 : vector<8x8xf32>
    %313 = math.exp %312 : vector<8x8xf32>
    %cst_121 = arith.constant dense<0.000000e+00> : vector<8xf32>
    %314 = vector.multi_reduction <add>, %313, %cst_121 [1] : vector<8x8xf32> to vector<8xf32>
    %315 = vector.shape_cast %314 : vector<8xf32> to vector<8x1xf32>
    %316 = tpu.reciprocal %315 {approx = true} : vector<8x1xf32> -> vector<8x1xf32>
    %317 = vector.broadcast %316 : vector<8x1xf32> to vector<8x8xf32>
    %318 = arith.mulf %313, %317 : vector<8x8xf32>
    %319 = arith.truncf %318 : vector<8x8xf32> to vector<8x8xbf16>
    %cst_122 = arith.constant dense<0.000000e+00> : vector<8x16xf32>
    %320 = tpu.matmul %319, %302, %cst_122 {dimension_numbers = #tpu.dot_dimension_numbers<[1], [0], [0], [1], [0, 0, 1, 1], [], []>} : vector<8x8xbf16>, vector<8x16xbf16>, vector<8x16xf32> -> vector<8x16xf32>
    %321 = arith.truncf %320 : vector<8x16xf32> to vector<8x16xbf16>
    %322 = vector.extract_strided_slice %238 {offsets = [0, 0], sizes = [16, 32], strides = [1, 1]} : vector<32x32xbf16> to vector<16x32xbf16>
    %cst_123 = arith.constant dense<0.000000e+00> : vector<8x32xf32>
    %323 = tpu.matmul %321, %322, %cst_123 {dimension_numbers = #tpu.dot_dimension_numbers<[1], [0], [0], [1], [0, 0, 1, 1], [], []>} : vector<8x16xbf16>, vector<16x32xbf16>, vector<8x32xf32> -> vector<8x32xf32>
    %324 = arith.addf %299, %323 : vector<8x32xf32>
    %325 = vector.extract_strided_slice %245 {offsets = [8, 16], sizes = [8, 16], strides = [1, 1]} : vector<16x96xbf16> to vector<8x16xbf16>
    %326 = vector.extract_strided_slice %245 {offsets = [8, 48], sizes = [8, 16], strides = [1, 1]} : vector<16x96xbf16> to vector<8x16xbf16>
    %327 = vector.extract_strided_slice %245 {offsets = [8, 80], sizes = [8, 16], strides = [1, 1]} : vector<16x96xbf16> to vector<8x16xbf16>
    %328 = tpu.transpose %326, [1, 0] : vector<8x16xbf16> -> vector<16x8xbf16>
    %cst_124 = arith.constant dense<0.000000e+00> : vector<8x8xf32>
    %329 = tpu.matmul %325, %328, %cst_124 {dimension_numbers = #tpu.dot_dimension_numbers<[1], [0], [0], [1], [0, 0, 1, 1], [], []>} : vector<8x16xbf16>, vector<16x8xbf16>, vector<8x8xf32> -> vector<8x8xf32>
    %cst_125 = arith.constant 2.500000e-01 : f32
    %330 = vector.broadcast %cst_125 : f32 to vector<8x8xf32>
    %331 = arith.mulf %329, %330 : vector<8x8xf32>
    %332 = vector.broadcast %298 : vector<1x8xf32> to vector<8x8xf32>
    %333 = arith.addf %331, %332 : vector<8x8xf32>
    %cst_126 = arith.constant dense<0xFF800000> : vector<8xf32>
    %334 = vector.multi_reduction <maximumf>, %333, %cst_126 [1] : vector<8x8xf32> to vector<8xf32>
    %335 = vector.shape_cast %334 : vector<8xf32> to vector<8x1xf32>
    %336 = vector.broadcast %335 : vector<8x1xf32> to vector<8x8xf32>
    %337 = arith.subf %333, %336 : vector<8x8xf32>
    %338 = math.exp %337 : vector<8x8xf32>
    %cst_127 = arith.constant dense<0.000000e+00> : vector<8xf32>
    %339 = vector.multi_reduction <add>, %338, %cst_127 [1] : vector<8x8xf32> to vector<8xf32>
    %340 = vector.shape_cast %339 : vector<8xf32> to vector<8x1xf32>
    %341 = tpu.reciprocal %340 {approx = true} : vector<8x1xf32> -> vector<8x1xf32>
    %342 = vector.broadcast %341 : vector<8x1xf32> to vector<8x8xf32>
    %343 = arith.mulf %338, %342 : vector<8x8xf32>
    %344 = arith.truncf %343 : vector<8x8xf32> to vector<8x8xbf16>
    %cst_128 = arith.constant dense<0.000000e+00> : vector<8x16xf32>
    %345 = tpu.matmul %344, %327, %cst_128 {dimension_numbers = #tpu.dot_dimension_numbers<[1], [0], [0], [1], [0, 0, 1, 1], [], []>} : vector<8x8xbf16>, vector<8x16xbf16>, vector<8x16xf32> -> vector<8x16xf32>
    %346 = arith.truncf %345 : vector<8x16xf32> to vector<8x16xbf16>
    %347 = vector.extract_strided_slice %238 {offsets = [16, 0], sizes = [16, 32], strides = [1, 1]} : vector<32x32xbf16> to vector<16x32xbf16>
    %cst_129 = arith.constant dense<0.000000e+00> : vector<8x32xf32>
    %348 = tpu.matmul %346, %347, %cst_129 {dimension_numbers = #tpu.dot_dimension_numbers<[1], [0], [0], [1], [0, 0, 1, 1], [], []>} : vector<8x16xbf16>, vector<16x32xbf16>, vector<8x32xf32> -> vector<8x32xf32>
    %349 = arith.addf %324, %348 : vector<8x32xf32>
    %350 = tpu.concatenate %297, %349 in 0 : vector<8x32xf32>, vector<8x32xf32> -> vector<16x32xf32>
    %351 = vector.broadcast %240 : vector<1x32xf32> to vector<16x32xf32>
    %352 = arith.addf %350, %351 : vector<16x32xf32>
    %353 = arith.addf %352, %232 : vector<16x32xf32>
    %c1_130 = arith.constant 1 : index
    %c0_131 = arith.constant 0 : index
    %c0_132 = arith.constant 0 : index
    %354 = vector.load %arg8[%c1_130, %c0_131, %c0_132] : memref<2x1x32xf32, #tpu.memory_space<vmem>>, vector<1x1x32xf32>
    %355 = vector.shape_cast %354 : vector<1x1x32xf32> to vector<1x32xf32>
    %c1_133 = arith.constant 1 : index
    %c0_134 = arith.constant 0 : index
    %c0_135 = arith.constant 0 : index
    %356 = vector.load %arg9[%c1_133, %c0_134, %c0_135] : memref<2x1x32xf32, #tpu.memory_space<vmem>>, vector<1x1x32xf32>
    %357 = vector.shape_cast %356 : vector<1x1x32xf32> to vector<1x32xf32>
    %cst_136 = arith.constant dense<0.000000e+00> : vector<16xf32>
    %358 = vector.multi_reduction <add>, %353, %cst_136 [1] : vector<16x32xf32> to vector<16xf32>
    %359 = vector.shape_cast %358 : vector<16xf32> to vector<16x1xf32>
    %cst_137 = arith.constant 3.200000e+01 : f32
    %360 = vector.broadcast %cst_137 : f32 to vector<16x1xf32>
    %361 = arith.divf %359, %360 : vector<16x1xf32>
    %362 = vector.broadcast %361 : vector<16x1xf32> to vector<16x32xf32>
    %363 = arith.subf %353, %362 : vector<16x32xf32>
    %364 = arith.mulf %363, %363 : vector<16x32xf32>
    %cst_138 = arith.constant dense<0.000000e+00> : vector<16xf32>
    %365 = vector.multi_reduction <add>, %364, %cst_138 [1] : vector<16x32xf32> to vector<16xf32>
    %366 = vector.shape_cast %365 : vector<16xf32> to vector<16x1xf32>
    %cst_139 = arith.constant 3.200000e+01 : f32
    %367 = vector.broadcast %cst_139 : f32 to vector<16x1xf32>
    %368 = arith.divf %366, %367 : vector<16x1xf32>
    %369 = vector.broadcast %361 : vector<16x1xf32> to vector<16x32xf32>
    %370 = arith.subf %353, %369 : vector<16x32xf32>
    %cst_140 = arith.constant 9.99999996E-13 : f32
    %371 = vector.broadcast %cst_140 : f32 to vector<16x1xf32>
    %372 = arith.addf %368, %371 : vector<16x1xf32>
    %373 = math.rsqrt %372 : vector<16x1xf32>
    %374 = vector.broadcast %373 : vector<16x1xf32> to vector<16x32xf32>
    %375 = arith.mulf %370, %374 : vector<16x32xf32>
    %376 = vector.broadcast %355 : vector<1x32xf32> to vector<16x32xf32>
    %377 = arith.mulf %375, %376 : vector<16x32xf32>
    %378 = vector.broadcast %357 : vector<1x32xf32> to vector<16x32xf32>
    %379 = arith.addf %377, %378 : vector<16x32xf32>
    %380 = arith.truncf %379 : vector<16x32xf32> to vector<16x32xbf16>
    %c1_141 = arith.constant 1 : index
    %c0_142 = arith.constant 0 : index
    %c0_143 = arith.constant 0 : index
    %381 = vector.load %arg10[%c1_141, %c0_142, %c0_143] : memref<2x32x64xbf16, #tpu.memory_space<vmem>>, vector<1x32x64xbf16>
    %382 = vector.shape_cast %381 : vector<1x32x64xbf16> to vector<32x64xbf16>
    %cst_144 = arith.constant dense<0.000000e+00> : vector<16x64xf32>
    %383 = tpu.matmul %380, %382, %cst_144 {dimension_numbers = #tpu.dot_dimension_numbers<[1], [0], [0], [1], [0, 0, 1, 1], [], []>} : vector<16x32xbf16>, vector<32x64xbf16>, vector<16x64xf32> -> vector<16x64xf32>
    %c1_145 = arith.constant 1 : index
    %c0_146 = arith.constant 0 : index
    %c0_147 = arith.constant 0 : index
    %384 = vector.load %arg11[%c1_145, %c0_146, %c0_147] : memref<2x1x64xf32, #tpu.memory_space<vmem>>, vector<1x1x64xf32>
    %385 = vector.shape_cast %384 : vector<1x1x64xf32> to vector<1x64xf32>
    %386 = vector.broadcast %385 : vector<1x64xf32> to vector<16x64xf32>
    %387 = arith.addf %383, %386 : vector<16x64xf32>
    %cst_148 = arith.constant 5.000000e-01 : f32
    %388 = vector.broadcast %cst_148 : f32 to vector<16x64xf32>
    %389 = arith.mulf %388, %387 : vector<16x64xf32>
    %cst_149 = arith.constant 4.471500e-02 : f32
    %390 = vector.broadcast %cst_149 : f32 to vector<16x64xf32>
    %391 = arith.mulf %390, %387 : vector<16x64xf32>
    %392 = arith.mulf %391, %387 : vector<16x64xf32>
    %393 = arith.mulf %392, %387 : vector<16x64xf32>
    %394 = arith.addf %387, %393 : vector<16x64xf32>
    %cst_150 = arith.constant 0.797884583 : f32
    %395 = vector.broadcast %cst_150 : f32 to vector<16x64xf32>
    %396 = arith.mulf %395, %394 : vector<16x64xf32>
    %397 = math.tanh %396 : vector<16x64xf32>
    %cst_151 = arith.constant 1.000000e+00 : f32
    %398 = vector.broadcast %cst_151 : f32 to vector<16x64xf32>
    %399 = arith.addf %398, %397 : vector<16x64xf32>
    %400 = arith.mulf %389, %399 : vector<16x64xf32>
    %401 = arith.truncf %400 : vector<16x64xf32> to vector<16x64xbf16>
    %c1_152 = arith.constant 1 : index
    %c0_153 = arith.constant 0 : index
    %c0_154 = arith.constant 0 : index
    %402 = vector.load %arg12[%c1_152, %c0_153, %c0_154] : memref<2x64x32xbf16, #tpu.memory_space<vmem>>, vector<1x64x32xbf16>
    %403 = vector.shape_cast %402 : vector<1x64x32xbf16> to vector<64x32xbf16>
    %cst_155 = arith.constant dense<0.000000e+00> : vector<16x32xf32>
    %404 = tpu.matmul %401, %403, %cst_155 {dimension_numbers = #tpu.dot_dimension_numbers<[1], [0], [0], [1], [0, 0, 1, 1], [], []>} : vector<16x64xbf16>, vector<64x32xbf16>, vector<16x32xf32> -> vector<16x32xf32>
    %c1_156 = arith.constant 1 : index
    %c0_157 = arith.constant 0 : index
    %c0_158 = arith.constant 0 : index
    %405 = vector.load %arg13[%c1_156, %c0_157, %c0_158] : memref<2x1x32xf32, #tpu.memory_space<vmem>>, vector<1x1x32xf32>
    %406 = vector.shape_cast %405 : vector<1x1x32xf32> to vector<1x32xf32>
    %407 = vector.broadcast %406 : vector<1x32xf32> to vector<16x32xf32>
    %408 = arith.addf %404, %407 : vector<16x32xf32>
    %409 = arith.addf %408, %379 : vector<16x32xf32>
    %c1_159 = arith.constant 1 : index
    %c0_160 = arith.constant 0 : index
    %c0_161 = arith.constant 0 : index
    %410 = vector.load %arg14[%c1_159, %c0_160, %c0_161] : memref<2x1x32xf32, #tpu.memory_space<vmem>>, vector<1x1x32xf32>
    %411 = vector.shape_cast %410 : vector<1x1x32xf32> to vector<1x32xf32>
    %c1_162 = arith.constant 1 : index
    %c0_163 = arith.constant 0 : index
    %c0_164 = arith.constant 0 : index
    %412 = vector.load %arg15[%c1_162, %c0_163, %c0_164] : memref<2x1x32xf32, #tpu.memory_space<vmem>>, vector<1x1x32xf32>
    %413 = vector.shape_cast %412 : vector<1x1x32xf32> to vector<1x32xf32>
    %cst_165 = arith.constant dense<0.000000e+00> : vector<16xf32>
    %414 = vector.multi_reduction <add>, %409, %cst_165 [1] : vector<16x32xf32> to vector<16xf32>
    %415 = vector.shape_cast %414 : vector<16xf32> to vector<16x1xf32>
    %cst_166 = arith.constant 3.200000e+01 : f32
    %416 = vector.broadcast %cst_166 : f32 to vector<16x1xf32>
    %417 = arith.divf %415, %416 : vector<16x1xf32>
    %418 = vector.broadcast %417 : vector<16x1xf32> to vector<16x32xf32>
    %419 = arith.subf %409, %418 : vector<16x32xf32>
    %420 = arith.mulf %419, %419 : vector<16x32xf32>
    %cst_167 = arith.constant dense<0.000000e+00> : vector<16xf32>
    %421 = vector.multi_reduction <add>, %420, %cst_167 [1] : vector<16x32xf32> to vector<16xf32>
    %422 = vector.shape_cast %421 : vector<16xf32> to vector<16x1xf32>
    %cst_168 = arith.constant 3.200000e+01 : f32
    %423 = vector.broadcast %cst_168 : f32 to vector<16x1xf32>
    %424 = arith.divf %422, %423 : vector<16x1xf32>
    %425 = vector.broadcast %417 : vector<16x1xf32> to vector<16x32xf32>
    %426 = arith.subf %409, %425 : vector<16x32xf32>
    %cst_169 = arith.constant 9.99999996E-13 : f32
    %427 = vector.broadcast %cst_169 : f32 to vector<16x1xf32>
    %428 = arith.addf %424, %427 : vector<16x1xf32>
    %429 = math.rsqrt %428 : vector<16x1xf32>
    %430 = vector.broadcast %429 : vector<16x1xf32> to vector<16x32xf32>
    %431 = arith.mulf %426, %430 : vector<16x32xf32>
    %432 = vector.broadcast %411 : vector<1x32xf32> to vector<16x32xf32>
    %433 = arith.mulf %431, %432 : vector<16x32xf32>
    %434 = vector.broadcast %413 : vector<1x32xf32> to vector<16x32xf32>
    %435 = arith.addf %433, %434 : vector<16x32xf32>
    %436 = vector.extract_strided_slice %435 {offsets = [0, 0], sizes = [1, 32], strides = [1, 1]} : vector<16x32xf32> to vector<1x32xf32>
    %437 = vector.extract_strided_slice %435 {offsets = [8, 0], sizes = [1, 32], strides = [1, 1]} : vector<16x32xf32> to vector<1x32xf32>
    %438 = tpu.concatenate %436, %437 in 0 : vector<1x32xf32>, vector<1x32xf32> -> vector<2x32xf32>
    %439 = arith.truncf %438 : vector<2x32xf32> to vector<2x32xbf16>
    %c0_170 = arith.constant 0 : index
    %c0_171 = arith.constant 0 : index
    %440 = vector.load %arg16[%c0_170, %c0_171] : memref<32x128xbf16, #tpu.memory_space<vmem>>, vector<32x128xbf16>
    %cst_172 = arith.constant dense<0.000000e+00> : vector<2x128xf32>
    %441 = tpu.matmul %439, %440, %cst_172 {dimension_numbers = #tpu.dot_dimension_numbers<[1], [0], [0], [1], [0, 0, 1, 1], [], []>} : vector<2x32xbf16>, vector<32x128xbf16>, vector<2x128xf32> -> vector<2x128xf32>
    %c0_173 = arith.constant 0 : index
    %c0_174 = arith.constant 0 : index
    %442 = vector.load %arg17[%c0_173, %c0_174] : memref<1x128xf32, #tpu.memory_space<vmem>>, vector<1x128xf32>
    %443 = vector.broadcast %442 : vector<1x128xf32> to vector<2x128xf32>
    %444 = arith.addf %441, %443 : vector<2x128xf32>
    %c0_175 = arith.constant 0 : index
    %c0_176 = arith.constant 0 : index
    %445 = vector.load %arg18[%c0_175, %c0_176] : memref<2x128xf32, #tpu.memory_space<vmem>>, vector<2x128xf32>
    tpu.vector_store %arg18[%c0_175, %c0_176], %444 {strides = array<i32>} : memref<2x128xf32, #tpu.memory_space<vmem>>, vector<2x128xf32>,
    return
  }
}

</mosaic_0001>

<llo_original>
// kernel: model_forward.1
$region0: #{model_forward.1}
  #allocation0 [shape = 'u32[]', space=smem, size = 0x4, offset = 0x4, fixed_abs, tag = 'smem constant byte address 0x4 - core index']
  #allocation1 [shape = 'u32[72,128]{1,0:T(1,128)}', space=vmem, size = 0x9000, scoped, tag = 'internal scratch']
  %s0 = inlined_call_operand.vmem [shape: f32[16,32], index: 0, kind: input, shape index: {}]
  %s1 = inlined_call_operand.vmem [shape: f32[2,8], index: 1, kind: input, shape index: {}]
  %s2 = inlined_call_operand.vmem [shape: f32[1,32], index: 2, kind: input, shape index: {}]
  %s3 = inlined_call_operand.vmem [shape: f32[1,32], index: 3, kind: input, shape index: {}]
  %s4 = inlined_call_operand.vmem [shape: bf16[2,32,96], index: 4, kind: input, shape index: {}]
  %s5 = inlined_call_operand.vmem [shape: f32[2,1,96], index: 5, kind: input, shape index: {}]
  %s6 = inlined_call_operand.vmem [shape: bf16[2,32,32], index: 6, kind: input, shape index: {}]
  %s7 = inlined_call_operand.vmem [shape: f32[2,1,32], index: 7, kind: input, shape index: {}]
  %s8 = inlined_call_operand.vmem [shape: f32[2,1,32], index: 8, kind: input, shape index: {}]
  %s9 = inlined_call_operand.vmem [shape: f32[2,1,32], index: 9, kind: input, shape index: {}]
  %s10 = inlined_call_operand.vmem [shape: bf16[2,32,64], index: 10, kind: input, shape index: {}]
  %s11 = inlined_call_operand.vmem [shape: f32[2,1,64], index: 11, kind: input, shape index: {}]
  %s12 = inlined_call_operand.vmem [shape: bf16[2,64,32], index: 12, kind: input, shape index: {}]
  %s13 = inlined_call_operand.vmem [shape: f32[2,1,32], index: 13, kind: input, shape index: {}]
  %s14 = inlined_call_operand.vmem [shape: f32[2,1,32], index: 14, kind: input, shape index: {}]
  %s15 = inlined_call_operand.vmem [shape: f32[2,1,32], index: 15, kind: input, shape index: {}]
  %s16 = inlined_call_operand.vmem [shape: bf16[32,128], index: 16, kind: input, shape index: {}]
  %s17 = inlined_call_operand.vmem [shape: f32[1,128], index: 17, kind: input, shape index: {}]
  %s18 = inlined_call_operand.vmem [shape: f32[2,128], index: 18, kind: output, shape index: {}]
  %s19 = sld [smem:[#allocation0]]
  $region82: #{model_forward.1} parent=0
    _
  %s21 = ssub.s32 1, %s19
  %s22 = scalar_select 0, %s21, %s19
  // Predicated region
  $region2: #{model_forward.1} parent=0 // pred_check
    _
  $region3: #{model_forward.1} parent=0 // pred_check_branch
    %24 = sbr.rel (0) target = $region5
  $region4: #{model_forward.1} parent=0 // pred_region
    _
  $region5: #{model_forward.1} parent=0 // pred_fallthru
    _
  // Predicated region
  $region6: #{model_forward.1} parent=0 // pred_check
    _
  $region7: #{model_forward.1} parent=0 // pred_check_branch
    %26 = sbr.rel (0) target = $region9
  $region8: #{model_forward.1} parent=0 // pred_region
    _
  $region9: #{model_forward.1} parent=0 // pred_fallthru
    _
  // Predicated region
  $region10: #{model_forward.1} parent=0 // pred_check
    _
  $region11: #{model_forward.1} parent=0 // pred_check_branch
    %28 = sbr.rel (0) target = $region13
  $region12: #{model_forward.1} parent=0 // pred_region
    _
  $region13: #{model_forward.1} parent=0 // pred_fallthru
    _
  // Predicated region
  $region14: #{model_forward.1} parent=0 // pred_check
    _
  $region15: #{model_forward.1} parent=0 // pred_check_branch
    %30 = sbr.rel (0) target = $region17
  $region16: #{model_forward.1} parent=0 // pred_region
    _
  $region17: #{model_forward.1} parent=0 // pred_fallthru
    _
  // Predicated region
  $region18: #{model_forward.1} parent=0 // pred_check
    _
  $region19: #{model_forward.1} parent=0 // pred_check_branch
    %32 = sbr.rel (0) target = $region21
  $region20: #{model_forward.1} parent=0 // pred_region
    _
  $region21: #{model_forward.1} parent=0 // pred_fallthru
    _
  // Predicated region
  $region22: #{model_forward.1} parent=0 // pred_check
    _
  $region23: #{model_forward.1} parent=0 // pred_check_branch
    %34 = sbr.rel (0) target = $region25
  $region24: #{model_forward.1} parent=0 // pred_region
    _
  $region25: #{model_forward.1} parent=0 // pred_fallthru
    _
  // Predicated region
  $region26: #{model_forward.1} parent=0 // pred_check
    _
  $region27: #{model_forward.1} parent=0 // pred_check_branch
    %36 = sbr.rel (0) target = $region29
  $region28: #{model_forward.1} parent=0 // pred_region
    _
  $region29: #{model_forward.1} parent=0 // pred_fallthru
    _
  // Predicated region
  $region30: #{model_forward.1} parent=0 // pred_check
    _
  $region31: #{model_forward.1} parent=0 // pred_check_branch
    %38 = sbr.rel (0) target = $region33
  $region32: #{model_forward.1} parent=0 // pred_region
    _
  $region33: #{model_forward.1} parent=0 // pred_fallthru
    _
  // Predicated region
  $region34: #{model_forward.1} parent=0 // pred_check
    _
  $region35: #{model_forward.1} parent=0 // pred_check_branch
    %40 = sbr.rel (0) target = $region37
  $region36: #{model_forward.1} parent=0 // pred_region
    _
  $region37: #{model_forward.1} parent=0 // pred_fallthru
    _
  // Predicated region
  $region38: #{model_forward.1} parent=0 // pred_check
    _
  $region39: #{model_forward.1} parent=0 // pred_check_branch
    %42 = sbr.rel (0) target = $region41
  $region40: #{model_forward.1} parent=0 // pred_region
    _
  $region41: #{model_forward.1} parent=0 // pred_fallthru
    _
  // Predicated region
  $region42: #{model_forward.1} parent=0 // pred_check
    _
  $region43: #{model_forward.1} parent=0 // pred_check_branch
    %44 = sbr.rel (0) target = $region45
  $region44: #{model_forward.1} parent=0 // pred_region
    _
  $region45: #{model_forward.1} parent=0 // pred_fallthru
    _
  // Predicated region
  $region46: #{model_forward.1} parent=0 // pred_check
    _
  $region47: #{model_forward.1} parent=0 // pred_check_branch
    %46 = sbr.rel (0) target = $region49
  $region48: #{model_forward.1} parent=0 // pred_region
    _
  $region49: #{model_forward.1} parent=0 // pred_fallthru
    _
  // Predicated region
  $region50: #{model_forward.1} parent=0 // pred_check
    _
  $region51: #{model_forward.1} parent=0 // pred_check_branch
    %48 = sbr.rel (0) target = $region53
  $region52: #{model_forward.1} parent=0 // pred_region
    _
  $region53: #{model_forward.1} parent=0 // pred_fallthru
    _
  // Predicated region
  $region54: #{model_forward.1} parent=0 // pred_check
    _
  $region55: #{model_forward.1} parent=0 // pred_check_branch
    %50 = sbr.rel (0) target = $region57
  $region56: #{model_forward.1} parent=0 // pred_region
    _
  $region57: #{model_forward.1} parent=0 // pred_fallthru
    _
  // Predicated region
  $region58: #{model_forward.1} parent=0 // pred_check
    _
  $region59: #{model_forward.1} parent=0 // pred_check_branch
    %52 = sbr.rel (0) target = $region61
  $region60: #{model_forward.1} parent=0 // pred_region
    _
  $region61: #{model_forward.1} parent=0 // pred_fallthru
    _
  // Predicated region
  $region62: #{model_forward.1} parent=0 // pred_check
    _
  $region63: #{model_forward.1} parent=0 // pred_check_branch
    %54 = sbr.rel (0) target = $region65
  $region64: #{model_forward.1} parent=0 // pred_region
    _
  $region65: #{model_forward.1} parent=0 // pred_fallthru
    _
  // Predicated region
  $region66: #{model_forward.1} parent=0 // pred_check
    _
  $region67: #{model_forward.1} parent=0 // pred_check_branch
    %56 = sbr.rel (0) target = $region69
  $region68: #{model_forward.1} parent=0 // pred_region
    _
  $region69: #{model_forward.1} parent=0 // pred_fallthru
    _
  // Predicated region
  $region70: #{model_forward.1} parent=0 // pred_check
    _
  $region71: #{model_forward.1} parent=0 // pred_check_branch
    %58 = sbr.rel (0) target = $region73
  $region72: #{model_forward.1} parent=0 // pred_region
    _
  $region73: #{model_forward.1} parent=0 // pred_fallthru
    _
  %v60 = vld [vmem:[%s0] sm:$0xff]
  %v61 = vld [vmem:[%s0 + $0x8] sm:$0xff]
  %v62 = vld [vmem:[%s2] sm:$0x1]
  %v63 = vld [vmem:[%s3] sm:$0x1]
  %vm64 = vcmask 261120
  %v65 = vsel %vm64, %v60, 0.0
  %66 = vadd.xlane.f32.xlu0 %v65
  %v67 = vpop.xlane.xlu0 %66
  %v68 = vsel %vm64, %v61, 0.0
  %69 = vadd.xlane.f32.xlu0 %v68
  %v70 = vpop.xlane.xlu0 %69
  %v71 = vrcp.pop 32.0
  %v72 = vmul.f32 32.0, %v71
  %v73 = vsub.f32 1.0, %v72
  %v74 = vmul.f32 %v71, %v73
  %v75 = vadd.f32 %v71, %v74
  %vm76 = vweird.f32 %v71
  %v77 = vsel %vm76, %v71, %v75
  %v78 = vmul.f32 %v67, %v77
  %v79 = vmul.f32 %v70, %v77
  %v80 = vsub.f32 %v60, %v78
  %v81 = vsub.f32 %v61, %v79
  %v82 = vmul.f32 %v80, %v80
  %v83 = vmul.f32 %v81, %v81
  %v84 = vsel %vm64, %v82, 0.0
  %85 = vadd.xlane.f32.xlu0 %v84
  %v86 = vpop.xlane.xlu0 %85
  %v87 = vsel %vm64, %v83, 0.0
  %88 = vadd.xlane.f32.xlu0 %v87
  %v89 = vpop.xlane.xlu0 %88
  %v90 = vmul.f32 %v86, %v77
  %v91 = vmul.f32 %v89, %v77
  %v92 = vadd.f32 %v90, 1e-12
  %v93 = vadd.f32 %v91, 1e-12
  %v94 = vrsqrt.pop %v92
  %v95 = vmul.f32 %v94, %v92
  %v96 = vmul.f32 %v95, %v94
  %v97 = vmul.f32 0.5, %v96
  %v98 = vsub.f32 1.5, %v97
  %v99 = vmul.f32 %v94, %v98
  %vm100 = vweird.f32 %v92
  %vm101 = vweird.f32 %v94
  %vm102 = vmor %vm100, %vm101
  %v103 = vsel %vm102, %v94, %v99
  %v104 = vrsqrt.pop %v93
  %v105 = vmul.f32 %v104, %v93
  %v106 = vmul.f32 %v105, %v104
  %v107 = vmul.f32 0.5, %v106
  %v108 = vsub.f32 1.5, %v107
  %v109 = vmul.f32 %v104, %v108
  %vm110 = vweird.f32 %v93
  %vm111 = vweird.f32 %v104
  %vm112 = vmor %vm110, %vm111
  %v113 = vsel %vm112, %v104, %v109
  %v114 = vmul.f32 %v80, %v103
  %v115 = vmul.f32 %v81, %v113
  %v117 = vperm.slane %v62, 0
  %v119 = vmul.f32 %v114, %v117
  %v120 = vmul.f32 %v115, %v117
  %v122 = vperm.slane %v63, 0
  %v124 = vadd.f32 %v119, %v122
  %v125 = vadd.f32 %v120, %v122
  %v126 = vld [vmem:[%s1] sm:$0x3]
  %v127 = vsub.f32 1.0, %v126
  %v128 = vmul.f32 %v127, -10000.0
  %v129 = vld [vmem:[%s4] sm:$0xf]
  %v130 = vld [vmem:[%s4 + $0x4] sm:$0xf]
  %v131 = vld [vmem:[%s4 + $0x8] sm:$0xf]
  %v132 = vld [vmem:[%s4 + $0xc] sm:$0xf]
  %v133 = vld [vmem:[%s5] sm:$0x1]
  %v134 = vld [vmem:[%s6] sm:$0xf]
  %v135 = vld [vmem:[%s6 + $0x4] sm:$0xf]
  %v136 = vld [vmem:[%s6 + $0x8] sm:$0xf]
  %v137 = vld [vmem:[%s6 + $0xc] sm:$0xf]
  %v138 = vld [vmem:[%s7] sm:$0x1]
  %v139 = vpack.c.bf16 %v125, %v124
  %v141 = vperm.slane %v133, 0
  %v147 = vunpack.c.l.b16 %v129
  %v148 = vunpack.c.l.b16 %v130
  %v149 = vunpack.c.l.b16 %v131
  %v150 = vunpack.c.l.b16 %v132
  %v151 = vpack.c.b16 %v148, %v147
  %v152 = vpack.c.b16 %v150, %v149
  %v156 = vsel %vm64, %v139, 0
  %158 = vmatpush.bf16.msra.mxu0 0
  %159 = vmatpush.bf16.msra.mxu0 0
  %160 = vmatpush.bf16.msra.mxu0 0
  %161 = vmatpush.bf16.msra.mxu0 0
  %162 = vmatpush.bf16.msra.mxu0 0
  %163 = vmatpush.bf16.msra.mxu0 0
  %164 = vmatpush.bf16.msra.mxu0 %v152
  %165 = vmatpush.bf16.msra.mxu0 %v151
  %166 = vmatmul.bf16.gmra.mxu0 %v156
  %v167 = vpop.f32.mrf.mxu0
  %v168 = vadd.f32 %v141, %v167
  %v169 = vpop.f32.mrf.mxu0
  %v170 = vadd.f32 %v141, %v169
  %171 = vdwg.mxu0
  %v172 = vpack.c.bf16 %v168, %v168
  %v173 = vpack.c.bf16 %v170, %v170
  %v175 = vunpack.c.l.b16 %v172
  %v176 = vpack.c.b16 %v175, %v175
  %177 = vrot.lane.b32.xlu0 %v176, 96
  %v178 = vpop.permute.xlu0 %177
  %vm179 = vcmask 130048
  %v181 = vsel %vm179, %v172, 0
  %v184 = vsel %vm179, %v178, 0
  %186 = vmatpush.bf16.xpose.msra.mxu0 0
  %187 = vmatpush.bf16.xpose.msra.mxu0 0
  %188 = vmatpush.bf16.xpose.msra.mxu0 0
  %189 = vmatpush.bf16.xpose.msra.mxu0 0
  %190 = vmatpush.bf16.xpose.msra.mxu0 0
  %191 = vmatpush.bf16.xpose.msra.mxu0 0
  %192 = vmatpush.bf16.xpose.msra.mxu0 0
  %193 = vmatpush.bf16.xpose.msra.mxu0 %v184
  %194 = vmatmul.bf16.gmra.mxu0 %v181
  %v195 = vpop.f32.mrf.mxu0
  %v196 = vadd.f32 0.0, %v195
  %v197 = vpop.f32.mrf.mxu0
  %198 = vdwg.mxu0
  %v199 = vmul.f32 %v196, 0.25
  %v200 = vperm.slane %v128, 0
  %v201 = vadd.f32 %v199, %v200
  %vm202 = vcmask 64512
  %v203 = vsel %vm202, %v201, -inf
  %204 = vmax.xlane.f32.xlu0 %v203
  %v205 = vpop.xlane.xlu0 %204
  %v206 = vsub.f32 %v201, %v205
  %v207 = vmul.f32 %v206, 1.442695
  %v208 = vpow.pop %v207
  %v209 = vsel %vm202, %v208, 0.0
  %210 = vadd.xlane.f32.xlu0 %v209
  %v211 = vpop.xlane.xlu0 %210
  %v212 = vrcp.pop %v211
  %v213 = vmul.f32 %v208, %v212
  %v214 = vpack.c.bf16 %v213, %v213
  %215 = vrot.lane.b32.xlu0 %v176, 64
  %v216 = vpop.permute.xlu0 %215
  %v218 = vsel %vm202, %v214, 0
  %vm220 = vcmask 1043456
  %v222 = vsel %vm220, %v216, 0
  %224 = vmatpush.bf16.msra.mxu0 0
  %225 = vmatpush.bf16.msra.mxu0 0
  %226 = vmatpush.bf16.msra.mxu0 0
  %227 = vmatpush.bf16.msra.mxu0 0
  %228 = vmatpush.bf16.msra.mxu0 0
  %229 = vmatpush.bf16.msra.mxu0 0
  %230 = vmatpush.bf16.msra.mxu0 0
  %231 = vmatpush.bf16.msra.mxu0 %v222
  %232 = vmatmul.bf16.gmra.mxu0 %v218
  %v233 = vpop.f32.mrf.mxu0
  %v234 = vadd.f32 0.0, %v233
  %v235 = vpop.f32.mrf.mxu0
  %236 = vdwg.mxu0
  %v237 = vpack.c.bf16 %v234, %v234
  %238 = vrot.lane.b32.xlu0 %v176, 112
  %v239 = vpop.permute.xlu0 %238
  %240 = vrot.lane.b32.xlu0 %v176, 80
  %v241 = vpop.permute.xlu0 %240
  %v243 = vsel %vm179, %v239, 0
  %v246 = vsel %vm179, %v241, 0
  %248 = vmatpush.bf16.xpose.msra.mxu0 0
  %249 = vmatpush.bf16.xpose.msra.mxu0 0
  %250 = vmatpush.bf16.xpose.msra.mxu0 0
  %251 = vmatpush.bf16.xpose.msra.mxu0 0
  %252 = vmatpush.bf16.xpose.msra.mxu0 0
  %253 = vmatpush.bf16.xpose.msra.mxu0 0
  %254 = vmatpush.bf16.xpose.msra.mxu0 0
  %255 = vmatpush.bf16.xpose.msra.mxu0 %v246
  %256 = vmatmul.bf16.gmra.mxu0 %v243
  %v257 = vpop.f32.mrf.mxu0
  %v258 = vadd.f32 0.0, %v257
  %v259 = vpop.f32.mrf.mxu0
  %260 = vdwg.mxu0
  %v261 = vmul.f32 %v258, 0.25
  %v262 = vadd.f32 %v261, %v200
  %v263 = vsel %vm202, %v262, -inf
  %264 = vmax.xlane.f32.xlu0 %v263
  %v265 = vpop.xlane.xlu0 %264
  %v266 = vsub.f32 %v262, %v265
  %v267 = vmul.f32 %v266, 1.442695
  %v268 = vpow.pop %v267
  %v269 = vsel %vm202, %v268, 0.0
  %270 = vadd.xlane.f32.xlu0 %v269
  %v271 = vpop.xlane.xlu0 %270
  %v272 = vrcp.pop %v271
  %v273 = vmul.f32 %v268, %v272
  %v274 = vpack.c.bf16 %v273, %v273
  %275 = vrot.lane.b32.xlu0 %v176, 48
  %v276 = vpop.permute.xlu0 %275
  %v278 = vsel %vm202, %v274, 0
  %v281 = vsel %vm220, %v276, 0
  %283 = vmatpush.bf16.msra.mxu0 0
  %284 = vmatpush.bf16.msra.mxu0 0
  %285 = vmatpush.bf16.msra.mxu0 0
  %286 = vmatpush.bf16.msra.mxu0 0
  %287 = vmatpush.bf16.msra.mxu0 0
  %288 = vmatpush.bf16.msra.mxu0 0
  %289 = vmatpush.bf16.msra.mxu0 0
  %290 = vmatpush.bf16.msra.mxu0 %v281
  %291 = vmatmul.bf16.gmra.mxu0 %v278
  %v292 = vpop.f32.mrf.mxu0
  %v293 = vadd.f32 0.0, %v292
  %v294 = vpop.f32.mrf.mxu0
  %295 = vdwg.mxu0
  %v296 = vpack.c.bf16 %v293, %v293
  %v299 = vunpack.c.l.b16 %v136
  %v300 = vunpack.c.l.b16 %v137
  %v301 = vpack.c.b16 %v300, %v299
  %v304 = vsel %vm179, %v296, 0
  %306 = vmatpush.bf16.msra.mxu0 0
  %307 = vmatpush.bf16.msra.mxu0 0
  %308 = vmatpush.bf16.msra.mxu0 0
  %309 = vmatpush.bf16.msra.mxu0 0
  %310 = vmatpush.bf16.msra.mxu0 0
  %311 = vmatpush.bf16.msra.mxu0 0
  %312 = vmatpush.bf16.msra.mxu0 0
  %313 = vmatpush.bf16.msra.mxu0 %v301
  %314 = vmatmul.bf16.gmra.mxu0 %v304
  %v315 = vpop.f32.mrf.mxu0
  %v316 = vadd.f32 0.0, %v315
  %v317 = vpop.f32.mrf.mxu0
  %318 = vdwg.mxu0
  %v321 = vunpack.c.l.b16 %v134
  %v322 = vunpack.c.l.b16 %v135
  %v323 = vpack.c.b16 %v322, %v321
  %v326 = vsel %vm179, %v237, 0
  %328 = vmatpush.bf16.msra.mxu0 0
  %329 = vmatpush.bf16.msra.mxu0 0
  %330 = vmatpush.bf16.msra.mxu0 0
  %331 = vmatpush.bf16.msra.mxu0 0
  %332 = vmatpush.bf16.msra.mxu0 0
  %333 = vmatpush.bf16.msra.mxu0 0
  %334 = vmatpush.bf16.msra.mxu0 0
  %335 = vmatpush.bf16.msra.mxu0 %v323
  %336 = vmatmul.bf16.gmra.mxu0 %v326
  %v337 = vpop.f32.mrf.mxu0
  %v338 = vadd.f32 %v316, %v337
  %v339 = vpop.f32.mrf.mxu0
  %340 = vdwg.mxu0
  %v342 = vunpack.c.l.b16 %v173
  %v343 = vpack.c.b16 %v342, %v342
  %344 = vrot.lane.b32.xlu0 %v343, 96
  %v345 = vpop.permute.xlu0 %344
  %v347 = vsel %vm179, %v173, 0
  %v350 = vsel %vm179, %v345, 0
  %352 = vmatpush.bf16.xpose.msra.mxu0 0
  %353 = vmatpush.bf16.xpose.msra.mxu0 0
  %354 = vmatpush.bf16.xpose.msra.mxu0 0
  %355 = vmatpush.bf16.xpose.msra.mxu0 0
  %356 = vmatpush.bf16.xpose.msra.mxu0 0
  %357 = vmatpush.bf16.xpose.msra.mxu0 0
  %358 = vmatpush.bf16.xpose.msra.mxu0 0
  %359 = vmatpush.bf16.xpose.msra.mxu0 %v350
  %360 = vmatmul.bf16.gmra.mxu0 %v347
  %v361 = vpop.f32.mrf.mxu0
  %v362 = vadd.f32 0.0, %v361
  %v363 = vpop.f32.mrf.mxu0
  %364 = vdwg.mxu0
  %v365 = vmul.f32 %v362, 0.25
  %v366 = vperm.slane %v128, 1
  %v367 = vadd.f32 %v365, %v366
  %v368 = vsel %vm202, %v367, -inf
  %369 = vmax.xlane.f32.xlu0 %v368
  %v370 = vpop.xlane.xlu0 %369
  %v371 = vsub.f32 %v367, %v370
  %v372 = vmul.f32 %v371, 1.442695
  %v373 = vpow.pop %v372
  %v374 = vsel %vm202, %v373, 0.0
  %375 = vadd.xlane.f32.xlu0 %v374
  %v376 = vpop.xlane.xlu0 %375
  %v377 = vrcp.pop %v376
  %v378 = vmul.f32 %v373, %v377
  %v379 = vpack.c.bf16 %v378, %v378
  %380 = vrot.lane.b32.xlu0 %v343, 64
  %v381 = vpop.permute.xlu0 %380
  %v383 = vsel %vm202, %v379, 0
  %v386 = vsel %vm220, %v381, 0
  %388 = vmatpush.bf16.msra.mxu0 0
  %389 = vmatpush.bf16.msra.mxu0 0
  %390 = vmatpush.bf16.msra.mxu0 0
  %391 = vmatpush.bf16.msra.mxu0 0
  %392 = vmatpush.bf16.msra.mxu0 0
  %393 = vmatpush.bf16.msra.mxu0 0
  %394 = vmatpush.bf16.msra.mxu0 0
  %395 = vmatpush.bf16.msra.mxu0 %v386
  %396 = vmatmul.bf16.gmra.mxu0 %v383
  %v397 = vpop.f32.mrf.mxu0
  %v398 = vadd.f32 0.0, %v397
  %v399 = vpop.f32.mrf.mxu0
  %400 = vdwg.mxu0
  %v401 = vpack.c.bf16 %v398, %v398
  %402 = vrot.lane.b32.xlu0 %v343, 112
  %v403 = vpop.permute.xlu0 %402
  %404 = vrot.lane.b32.xlu0 %v343, 80
  %v405 = vpop.permute.xlu0 %404
  %v407 = vsel %vm179, %v403, 0
  %v410 = vsel %vm179, %v405, 0
  %412 = vmatpush.bf16.xpose.msra.mxu0 0
  %413 = vmatpush.bf16.xpose.msra.mxu0 0
  %414 = vmatpush.bf16.xpose.msra.mxu0 0
  %415 = vmatpush.bf16.xpose.msra.mxu0 0
  %416 = vmatpush.bf16.xpose.msra.mxu0 0
  %417 = vmatpush.bf16.xpose.msra.mxu0 0
  %418 = vmatpush.bf16.xpose.msra.mxu0 0
  %419 = vmatpush.bf16.xpose.msra.mxu0 %v410
  %420 = vmatmul.bf16.gmra.mxu0 %v407
  %v421 = vpop.f32.mrf.mxu0
  %v422 = vadd.f32 0.0, %v421
  %v423 = vpop.f32.mrf.mxu0
  %424 = vdwg.mxu0
  %v425 = vmul.f32 %v422, 0.25
  %v426 = vadd.f32 %v425, %v366
  %v427 = vsel %vm202, %v426, -inf
  %428 = vmax.xlane.f32.xlu0 %v427
  %v429 = vpop.xlane.xlu0 %428
  %v430 = vsub.f32 %v426, %v429
  %v431 = vmul.f32 %v430, 1.442695
  %v432 = vpow.pop %v431
  %v433 = vsel %vm202, %v432, 0.0
  %434 = vadd.xlane.f32.xlu0 %v433
  %v435 = vpop.xlane.xlu0 %434
  %v436 = vrcp.pop %v435
  %v437 = vmul.f32 %v432, %v436
  %v438 = vpack.c.bf16 %v437, %v437
  %439 = vrot.lane.b32.xlu0 %v343, 48
  %v440 = vpop.permute.xlu0 %439
  %v442 = vsel %vm202, %v438, 0
  %v445 = vsel %vm220, %v440, 0
  %447 = vmatpush.bf16.msra.mxu0 0
  %448 = vmatpush.bf16.msra.mxu0 0
  %449 = vmatpush.bf16.msra.mxu0 0
  %450 = vmatpush.bf16.msra.mxu0 0
  %451 = vmatpush.bf16.msra.mxu0 0
  %452 = vmatpush.bf16.msra.mxu0 0
  %453 = vmatpush.bf16.msra.mxu0 0
  %454 = vmatpush.bf16.msra.mxu0 %v445
  %455 = vmatmul.bf16.gmra.mxu0 %v442
  %v456 = vpop.f32.mrf.mxu0
  %v457 = vadd.f32 0.0, %v456
  %v458 = vpop.f32.mrf.mxu0
  %459 = vdwg.mxu0
  %v460 = vpack.c.bf16 %v457, %v457
  %v462 = vsel %vm179, %v460, 0
  %464 = vmatpush.bf16.msra.mxu0 0
  %465 = vmatpush.bf16.msra.mxu0 0
  %466 = vmatpush.bf16.msra.mxu0 0
  %467 = vmatpush.bf16.msra.mxu0 0
  %468 = vmatpush.bf16.msra.mxu0 0
  %469 = vmatpush.bf16.msra.mxu0 0
  %470 = vmatpush.bf16.msra.mxu0 0
  %471 = vmatpush.bf16.msra.mxu0 %v301
  %472 = vmatmul.bf16.gmra.mxu0 %v462
  %v473 = vpop.f32.mrf.mxu0
  %v474 = vadd.f32 0.0, %v473
  %v475 = vpop.f32.mrf.mxu0
  %476 = vdwg.mxu0
  %v478 = vsel %vm179, %v401, 0
  %480 = vmatpush.bf16.msra.mxu0 0
  %481 = vmatpush.bf16.msra.mxu0 0
  %482 = vmatpush.bf16.msra.mxu0 0
  %483 = vmatpush.bf16.msra.mxu0 0
  %484 = vmatpush.bf16.msra.mxu0 0
  %485 = vmatpush.bf16.msra.mxu0 0
  %486 = vmatpush.bf16.msra.mxu0 0
  %487 = vmatpush.bf16.msra.mxu0 %v323
  %488 = vmatmul.bf16.gmra.mxu0 %v478
  %v489 = vpop.f32.mrf.mxu0
  %v490 = vadd.f32 %v474, %v489
  %v491 = vpop.f32.mrf.mxu0
  %492 = vdwg.mxu0
  %v494 = vperm.slane %v138, 0
  %v496 = vadd.f32 %v338, %v494
  %v497 = vadd.f32 %v490, %v494
  %v498 = vadd.f32 %v496, %v124
  %v499 = vadd.f32 %v497, %v125
  %v500 = vld [vmem:[%s8] sm:$0x1]
  %v501 = vld [vmem:[%s9] sm:$0x1]
  %v502 = vsel %vm64, %v498, 0.0
  %503 = vadd.xlane.f32.xlu0 %v502
  %v504 = vpop.xlane.xlu0 %503
  %v505 = vsel %vm64, %v499, 0.0
  %506 = vadd.xlane.f32.xlu0 %v505
  %v507 = vpop.xlane.xlu0 %506
  %v508 = vmul.f32 %v504, %v77
  %v509 = vmul.f32 %v507, %v77
  %v510 = vsub.f32 %v498, %v508
  %v511 = vsub.f32 %v499, %v509
  %v512 = vmul.f32 %v510, %v510
  %v513 = vmul.f32 %v511, %v511
  %v514 = vsel %vm64, %v512, 0.0
  %515 = vadd.xlane.f32.xlu0 %v514
  %v516 = vpop.xlane.xlu0 %515
  %v517 = vsel %vm64, %v513, 0.0
  %518 = vadd.xlane.f32.xlu0 %v517
  %v519 = vpop.xlane.xlu0 %518
  %v520 = vmul.f32 %v516, %v77
  %v521 = vmul.f32 %v519, %v77
  %v522 = vadd.f32 %v520, 1e-12
  %v523 = vadd.f32 %v521, 1e-12
  %v524 = vrsqrt.pop %v522
  %v525 = vmul.f32 %v524, %v522
  %v526 = vmul.f32 %v525, %v524
  %v527 = vmul.f32 0.5, %v526
  %v528 = vsub.f32 1.5, %v527
  %v529 = vmul.f32 %v524, %v528
  %vm530 = vweird.f32 %v522
  %vm531 = vweird.f32 %v524
  %vm532 = vmor %vm530, %vm531
  %v533 = vsel %vm532, %v524, %v529
  %v534 = vrsqrt.pop %v523
  %v535 = vmul.f32 %v534, %v523
  %v536 = vmul.f32 %v535, %v534
  %v537 = vmul.f32 0.5, %v536
  %v538 = vsub.f32 1.5, %v537
  %v539 = vmul.f32 %v534, %v538
  %vm540 = vweird.f32 %v523
  %vm541 = vweird.f32 %v534
  %vm542 = vmor %vm540, %vm541
  %v543 = vsel %vm542, %v534, %v539
  %v544 = vmul.f32 %v510, %v533
  %v545 = vmul.f32 %v511, %v543
  %v547 = vperm.slane %v500, 0
  %v549 = vmul.f32 %v544, %v547
  %v550 = vmul.f32 %v545, %v547
  %v552 = vperm.slane %v501, 0
  %v554 = vadd.f32 %v549, %v552
  %v555 = vadd.f32 %v550, %v552
  %v556 = vpack.c.bf16 %v555, %v554
  %v557 = vld [vmem:[%s10] sm:$0xf]
  %v558 = vld [vmem:[%s10 + $0x4] sm:$0xf]
  %v559 = vld [vmem:[%s10 + $0x8] sm:$0xf]
  %v560 = vld [vmem:[%s10 + $0xc] sm:$0xf]
  %v561 = vld [vmem:[%s11] sm:$0x1]
  %v563 = vperm.slane %v561, 0
  %v569 = vunpack.c.l.b16 %v557
  %v570 = vunpack.c.l.b16 %v558
  %v571 = vunpack.c.l.b16 %v559
  %v572 = vunpack.c.l.b16 %v560
  %v573 = vpack.c.b16 %v570, %v569
  %v574 = vpack.c.b16 %v572, %v571
  %v578 = vsel %vm64, %v556, 0
  %580 = vmatpush.bf16.msra.mxu0 0
  %581 = vmatpush.bf16.msra.mxu0 0
  %582 = vmatpush.bf16.msra.mxu0 0
  %583 = vmatpush.bf16.msra.mxu0 0
  %584 = vmatpush.bf16.msra.mxu0 0
  %585 = vmatpush.bf16.msra.mxu0 0
  %586 = vmatpush.bf16.msra.mxu0 %v574
  %587 = vmatpush.bf16.msra.mxu0 %v573
  %588 = vmatmul.bf16.gmra.mxu0 %v578
  %v589 = vpop.f32.mrf.mxu0
  %v590 = vadd.f32 %v563, %v589
  %v591 = vpop.f32.mrf.mxu0
  %v592 = vadd.f32 %v563, %v591
  %593 = vdwg.mxu0
  %v594 = vmul.f32 %v590, 0.5
  %v595 = vmul.f32 %v592, 0.5
  %v596 = vmul.f32 %v590, 0.044715
  %v597 = vmul.f32 %v592, 0.044715
  %v598 = vmul.f32 %v596, %v590
  %v599 = vmul.f32 %v597, %v592
  %v600 = vmul.f32 %v598, %v590
  %v601 = vmul.f32 %v599, %v592
  %v602 = vadd.f32 %v590, %v600
  %v603 = vadd.f32 %v592, %v601
  %v604 = vmul.f32 %v602, 0.7978846
  %v605 = vmul.f32 %v603, 0.7978846
  %v606 = vtanh.pop %v604
  %v607 = vtanh.pop %v605
  %v608 = vadd.f32 %v606, 1.0
  %v609 = vadd.f32 %v607, 1.0
  %v610 = vmul.f32 %v594, %v608
  %v611 = vmul.f32 %v595, %v609
  %v612 = vpack.c.bf16 %v611, %v610
  %v613 = vld [vmem:[%s12] sm:$0xf]
  %v614 = vld [vmem:[%s12 + $0x4] sm:$0xf]
  %v615 = vld [vmem:[%s12 + $0x8] sm:$0xf]
  %v616 = vld [vmem:[%s12 + $0xc] sm:$0xf]
  %v617 = vld [vmem:[%s12 + $0x10] sm:$0xf]
  %v618 = vld [vmem:[%s12 + $0x14] sm:$0xf]
  %v619 = vld [vmem:[%s12 + $0x18] sm:$0xf]
  %v620 = vld [vmem:[%s12 + $0x1c] sm:$0xf]
  %v621 = vld [vmem:[%s13] sm:$0x1]
  %v623 = vperm.slane %v621, 0
  %v633 = vunpack.c.l.b16 %v613
  %v634 = vunpack.c.l.b16 %v614
  %v635 = vunpack.c.l.b16 %v615
  %v636 = vunpack.c.l.b16 %v616
  %v637 = vunpack.c.l.b16 %v617
  %v638 = vunpack.c.l.b16 %v618
  %v639 = vunpack.c.l.b16 %v619
  %v640 = vunpack.c.l.b16 %v620
  %v641 = vpack.c.b16 %v634, %v633
  %v642 = vpack.c.b16 %v636, %v635
  %v643 = vpack.c.b16 %v638, %v637
  %v644 = vpack.c.b16 %v640, %v639
  %vm649 = vcmask 523264
  %v651 = vsel %vm649, %v612, 0
  %653 = vmatpush.bf16.msra.mxu0 0
  %654 = vmatpush.bf16.msra.mxu0 0
  %655 = vmatpush.bf16.msra.mxu0 0
  %656 = vmatpush.bf16.msra.mxu0 0
  %657 = vmatpush.bf16.msra.mxu0 %v644
  %658 = vmatpush.bf16.msra.mxu0 %v643
  %659 = vmatpush.bf16.msra.mxu0 %v642
  %660 = vmatpush.bf16.msra.mxu0 %v641
  %661 = vmatmul.bf16.gmra.mxu0 %v651
  %v662 = vpop.f32.mrf.mxu0
  %v663 = vadd.f32 %v623, %v662
  %v664 = vpop.f32.mrf.mxu0
  %v665 = vadd.f32 %v623, %v664
  %666 = vdwg.mxu0
  %v667 = vadd.f32 %v663, %v554
  %v668 = vadd.f32 %v665, %v555
  %v669 = vld [vmem:[%s14] sm:$0x1]
  %v670 = vld [vmem:[%s15] sm:$0x1]
  %v671 = vsel %vm64, %v667, 0.0
  %672 = vadd.xlane.f32.xlu0 %v671
  %v673 = vpop.xlane.xlu0 %672
  %v674 = vsel %vm64, %v668, 0.0
  %675 = vadd.xlane.f32.xlu0 %v674
  %v676 = vpop.xlane.xlu0 %675
  %v677 = vmul.f32 %v673, %v77
  %v678 = vmul.f32 %v676, %v77
  %v679 = vsub.f32 %v667, %v677
  %v680 = vsub.f32 %v668, %v678
  %v681 = vmul.f32 %v679, %v679
  %v682 = vmul.f32 %v680, %v680
  %v683 = vsel %vm64, %v681, 0.0
  %684 = vadd.xlane.f32.xlu0 %v683
  %v685 = vpop.xlane.xlu0 %684
  %v686 = vsel %vm64, %v682, 0.0
  %687 = vadd.xlane.f32.xlu0 %v686
  %v688 = vpop.xlane.xlu0 %687
  %v689 = vmul.f32 %v685, %v77
  %v690 = vmul.f32 %v688, %v77
  %v691 = vadd.f32 %v689, 1e-12
  %v692 = vadd.f32 %v690, 1e-12
  %v693 = vrsqrt.pop %v691
  %v694 = vmul.f32 %v693, %v691
  %v695 = vmul.f32 %v694, %v693
  %v696 = vmul.f32 0.5, %v695
  %v697 = vsub.f32 1.5, %v696
  %v698 = vmul.f32 %v693, %v697
  %vm699 = vweird.f32 %v691
  %vm700 = vweird.f32 %v693
  %vm701 = vmor %vm699, %vm700
  %v702 = vsel %vm701, %v693, %v698
  %v703 = vrsqrt.pop %v692
  %v704 = vmul.f32 %v703, %v692
  %v705 = vmul.f32 %v704, %v703
  %v706 = vmul.f32 0.5, %v705
  %v707 = vsub.f32 1.5, %v706
  %v708 = vmul.f32 %v703, %v707
  %vm709 = vweird.f32 %v692
  %vm710 = vweird.f32 %v703
  %vm711 = vmor %vm709, %vm710
  %v712 = vsel %vm711, %v703, %v708
  %v713 = vmul.f32 %v679, %v702
  %v714 = vmul.f32 %v680, %v712
  %v716 = vperm.slane %v669, 0
  %v718 = vmul.f32 %v713, %v716
  %v719 = vmul.f32 %v714, %v716
  %v721 = vperm.slane %v670, 0
  %v723 = vadd.f32 %v718, %v721
  %v724 = vadd.f32 %v719, %v721
  %s725 = scalar_lea.vmem %s4, 16
  %v726 = vld [vmem:[%s725] sm:$0xf]
  %v727 = vld [vmem:[%s725 + $0x4] sm:$0xf]
  %v728 = vld [vmem:[%s725 + $0x8] sm:$0xf]
  %v729 = vld [vmem:[%s725 + $0xc] sm:$0xf]
  %s730 = scalar_lea.vmem %s5, 1
  %v731 = vld [vmem:[%s730] sm:$0x1]
  %s732 = scalar_lea.vmem %s6, 16
  %v733 = vld [vmem:[%s732] sm:$0xf]
  %v734 = vld [vmem:[%s732 + $0x4] sm:$0xf]
  %v735 = vld [vmem:[%s732 + $0x8] sm:$0xf]
  %v736 = vld [vmem:[%s732 + $0xc] sm:$0xf]
  %s737 = scalar_lea.vmem %s7, 1
  %v738 = vld [vmem:[%s737] sm:$0x1]
  %v739 = vpack.c.bf16 %v724, %v723
  %v741 = vperm.slane %v731, 0
  %v747 = vunpack.c.l.b16 %v726
  %v748 = vunpack.c.l.b16 %v727
  %v749 = vunpack.c.l.b16 %v728
  %v750 = vunpack.c.l.b16 %v729
  %v751 = vpack.c.b16 %v748, %v747
  %v752 = vpack.c.b16 %v750, %v749
  %v756 = vsel %vm64, %v739, 0
  %758 = vmatpush.bf16.msra.mxu0 0
  %759 = vmatpush.bf16.msra.mxu0 0
  %760 = vmatpush.bf16.msra.mxu0 0
  %761 = vmatpush.bf16.msra.mxu0 0
  %762 = vmatpush.bf16.msra.mxu0 0
  %763 = vmatpush.bf16.msra.mxu0 0
  %764 = vmatpush.bf16.msra.mxu0 %v752
  %765 = vmatpush.bf16.msra.mxu0 %v751
  %766 = vmatmul.bf16.gmra.mxu0 %v756
  %v767 = vpop.f32.mrf.mxu0
  %v768 = vadd.f32 %v741, %v767
  %v769 = vpop.f32.mrf.mxu0
  %v770 = vadd.f32 %v741, %v769
  %771 = vdwg.mxu0
  %v772 = vpack.c.bf16 %v768, %v768
  %v773 = vpack.c.bf16 %v770, %v770
  %v775 = vunpack.c.l.b16 %v772
  %v776 = vpack.c.b16 %v775, %v775
  %777 = vrot.lane.b32.xlu0 %v776, 96
  %v778 = vpop.permute.xlu0 %777
  %v780 = vsel %vm179, %v772, 0
  %v783 = vsel %vm179, %v778, 0
  %785 = vmatpush.bf16.xpose.msra.mxu0 0
  %786 = vmatpush.bf16.xpose.msra.mxu0 0
  %787 = vmatpush.bf16.xpose.msra.mxu0 0
  %788 = vmatpush.bf16.xpose.msra.mxu0 0
  %789 = vmatpush.bf16.xpose.msra.mxu0 0
  %790 = vmatpush.bf16.xpose.msra.mxu0 0
  %791 = vmatpush.bf16.xpose.msra.mxu0 0
  %792 = vmatpush.bf16.xpose.msra.mxu0 %v783
  %793 = vmatmul.bf16.gmra.mxu0 %v780
  %v794 = vpop.f32.mrf.mxu0
  %v795 = vadd.f32 0.0, %v794
  %v796 = vpop.f32.mrf.mxu0
  %797 = vdwg.mxu0
  %v798 = vmul.f32 %v795, 0.25
  %v799 = vadd.f32 %v798, %v200
  %v800 = vsel %vm202, %v799, -inf
  %801 = vmax.xlane.f32.xlu0 %v800
  %v802 = vpop.xlane.xlu0 %801
  %v803 = vsub.f32 %v799, %v802
  %v804 = vmul.f32 %v803, 1.442695
  %v805 = vpow.pop %v804
  %v806 = vsel %vm202, %v805, 0.0
  %807 = vadd.xlane.f32.xlu0 %v806
  %v808 = vpop.xlane.xlu0 %807
  %v809 = vrcp.pop %v808
  %v810 = vmul.f32 %v805, %v809
  %v811 = vpack.c.bf16 %v810, %v810
  %812 = vrot.lane.b32.xlu0 %v776, 64
  %v813 = vpop.permute.xlu0 %812
  %v815 = vsel %vm202, %v811, 0
  %v818 = vsel %vm220, %v813, 0
  %820 = vmatpush.bf16.msra.mxu0 0
  %821 = vmatpush.bf16.msra.mxu0 0
  %822 = vmatpush.bf16.msra.mxu0 0
  %823 = vmatpush.bf16.msra.mxu0 0
  %824 = vmatpush.bf16.msra.mxu0 0
  %825 = vmatpush.bf16.msra.mxu0 0
  %826 = vmatpush.bf16.msra.mxu0 0
  %827 = vmatpush.bf16.msra.mxu0 %v818
  %828 = vmatmul.bf16.gmra.mxu0 %v815
  %v829 = vpop.f32.mrf.mxu0
  %v830 = vadd.f32 0.0, %v829
  %v831 = vpop.f32.mrf.mxu0
  %832 = vdwg.mxu0
  %v833 = vpack.c.bf16 %v830, %v830
  %834 = vrot.lane.b32.xlu0 %v776, 112
  %v835 = vpop.permute.xlu0 %834
  %836 = vrot.lane.b32.xlu0 %v776, 80
  %v837 = vpop.permute.xlu0 %836
  %v839 = vsel %vm179, %v835, 0
  %v842 = vsel %vm179, %v837, 0
  %844 = vmatpush.bf16.xpose.msra.mxu0 0
  %845 = vmatpush.bf16.xpose.msra.mxu0 0
  %846 = vmatpush.bf16.xpose.msra.mxu0 0
  %847 = vmatpush.bf16.xpose.msra.mxu0 0
  %848 = vmatpush.bf16.xpose.msra.mxu0 0
  %849 = vmatpush.bf16.xpose.msra.mxu0 0
  %850 = vmatpush.bf16.xpose.msra.mxu0 0
  %851 = vmatpush.bf16.xpose.msra.mxu0 %v842
  %852 = vmatmul.bf16.gmra.mxu0 %v839
  %v853 = vpop.f32.mrf.mxu0
  %v854 = vadd.f32 0.0, %v853
  %v855 = vpop.f32.mrf.mxu0
  %856 = vdwg.mxu0
  %v857 = vmul.f32 %v854, 0.25
  %v858 = vadd.f32 %v857, %v200
  %v859 = vsel %vm202, %v858, -inf
  %860 = vmax.xlane.f32.xlu0 %v859
  %v861 = vpop.xlane.xlu0 %860
  %v862 = vsub.f32 %v858, %v861
  %v863 = vmul.f32 %v862, 1.442695
  %v864 = vpow.pop %v863
  %v865 = vsel %vm202, %v864, 0.0
  %866 = vadd.xlane.f32.xlu0 %v865
  %v867 = vpop.xlane.xlu0 %866
  %v868 = vrcp.pop %v867
  %v869 = vmul.f32 %v864, %v868
  %v870 = vpack.c.bf16 %v869, %v869
  %871 = vrot.lane.b32.xlu0 %v776, 48
  %v872 = vpop.permute.xlu0 %871
  %v874 = vsel %vm202, %v870, 0
  %v877 = vsel %vm220, %v872, 0
  %879 = vmatpush.bf16.msra.mxu0 0
  %880 = vmatpush.bf16.msra.mxu0 0
  %881 = vmatpush.bf16.msra.mxu0 0
  %882 = vmatpush.bf16.msra.mxu0 0
  %883 = vmatpush.bf16.msra.mxu0 0
  %884 = vmatpush.bf16.msra.mxu0 0
  %885 = vmatpush.bf16.msra.mxu0 0
  %886 = vmatpush.bf16.msra.mxu0 %v877
  %887 = vmatmul.bf16.gmra.mxu0 %v874
  %v888 = vpop.f32.mrf.mxu0
  %v889 = vadd.f32 0.0, %v888
  %v890 = vpop.f32.mrf.mxu0
  %891 = vdwg.mxu0
  %v892 = vpack.c.bf16 %v889, %v889
  %v895 = vunpack.c.l.b16 %v735
  %v896 = vunpack.c.l.b16 %v736
  %v897 = vpack.c.b16 %v896, %v895
  %v900 = vsel %vm179, %v892, 0
  %902 = vmatpush.bf16.msra.mxu0 0
  %903 = vmatpush.bf16.msra.mxu0 0
  %904 = vmatpush.bf16.msra.mxu0 0
  %905 = vmatpush.bf16.msra.mxu0 0
  %906 = vmatpush.bf16.msra.mxu0 0
  %907 = vmatpush.bf16.msra.mxu0 0
  %908 = vmatpush.bf16.msra.mxu0 0
  %909 = vmatpush.bf16.msra.mxu0 %v897
  %910 = vmatmul.bf16.gmra.mxu0 %v900
  %v911 = vpop.f32.mrf.mxu0
  %v912 = vadd.f32 0.0, %v911
  %v913 = vpop.f32.mrf.mxu0
  %914 = vdwg.mxu0
  %v917 = vunpack.c.l.b16 %v733
  %v918 = vunpack.c.l.b16 %v734
  %v919 = vpack.c.b16 %v918, %v917
  %v922 = vsel %vm179, %v833, 0
  %924 = vmatpush.bf16.msra.mxu0 0
  %925 = vmatpush.bf16.msra.mxu0 0
  %926 = vmatpush.bf16.msra.mxu0 0
  %927 = vmatpush.bf16.msra.mxu0 0
  %928 = vmatpush.bf16.msra.mxu0 0
  %929 = vmatpush.bf16.msra.mxu0 0
  %930 = vmatpush.bf16.msra.mxu0 0
  %931 = vmatpush.bf16.msra.mxu0 %v919
  %932 = vmatmul.bf16.gmra.mxu0 %v922
  %v933 = vpop.f32.mrf.mxu0
  %v934 = vadd.f32 %v912, %v933
  %v935 = vpop.f32.mrf.mxu0
  %936 = vdwg.mxu0
  %v938 = vunpack.c.l.b16 %v773
  %v939 = vpack.c.b16 %v938, %v938
  %940 = vrot.lane.b32.xlu0 %v939, 96
  %v941 = vpop.permute.xlu0 %940
  %v943 = vsel %vm179, %v773, 0
  %v946 = vsel %vm179, %v941, 0
  %948 = vmatpush.bf16.xpose.msra.mxu0 0
  %949 = vmatpush.bf16.xpose.msra.mxu0 0
  %950 = vmatpush.bf16.xpose.msra.mxu0 0
  %951 = vmatpush.bf16.xpose.msra.mxu0 0
  %952 = vmatpush.bf16.xpose.msra.mxu0 0
  %953 = vmatpush.bf16.xpose.msra.mxu0 0
  %954 = vmatpush.bf16.xpose.msra.mxu0 0
  %955 = vmatpush.bf16.xpose.msra.mxu0 %v946
  %956 = vmatmul.bf16.gmra.mxu0 %v943
  %v957 = vpop.f32.mrf.mxu0
  %v958 = vadd.f32 0.0, %v957
  %v959 = vpop.f32.mrf.mxu0
  %960 = vdwg.mxu0
  %v961 = vmul.f32 %v958, 0.25
  %v962 = vadd.f32 %v961, %v366
  %v963 = vsel %vm202, %v962, -inf
  %964 = vmax.xlane.f32.xlu0 %v963
  %v965 = vpop.xlane.xlu0 %964
  %v966 = vsub.f32 %v962, %v965
  %v967 = vmul.f32 %v966, 1.442695
  %v968 = vpow.pop %v967
  %v969 = vsel %vm202, %v968, 0.0
  %970 = vadd.xlane.f32.xlu0 %v969
  %v971 = vpop.xlane.xlu0 %970
  %v972 = vrcp.pop %v971
  %v973 = vmul.f32 %v968, %v972
  %v974 = vpack.c.bf16 %v973, %v973
  %975 = vrot.lane.b32.xlu0 %v939, 64
  %v976 = vpop.permute.xlu0 %975
  %v978 = vsel %vm202, %v974, 0
  %v981 = vsel %vm220, %v976, 0
  %983 = vmatpush.bf16.msra.mxu0 0
  %984 = vmatpush.bf16.msra.mxu0 0
  %985 = vmatpush.bf16.msra.mxu0 0
  %986 = vmatpush.bf16.msra.mxu0 0
  %987 = vmatpush.bf16.msra.mxu0 0
  %988 = vmatpush.bf16.msra.mxu0 0
  %989 = vmatpush.bf16.msra.mxu0 0
  %990 = vmatpush.bf16.msra.mxu0 %v981
  %991 = vmatmul.bf16.gmra.mxu0 %v978
  %v992 = vpop.f32.mrf.mxu0
  %v993 = vadd.f32 0.0, %v992
  %v994 = vpop.f32.mrf.mxu0
  %995 = vdwg.mxu0
  %v996 = vpack.c.bf16 %v993, %v993
  %997 = vrot.lane.b32.xlu0 %v939, 112
  %v998 = vpop.permute.xlu0 %997
  %999 = vrot.lane.b32.xlu0 %v939, 80
  %v1000 = vpop.permute.xlu0 %999
  %v1002 = vsel %vm179, %v998, 0
  %v1005 = vsel %vm179, %v1000, 0
  %1007 = vmatpush.bf16.xpose.msra.mxu0 0
  %1008 = vmatpush.bf16.xpose.msra.mxu0 0
  %1009 = vmatpush.bf16.xpose.msra.mxu0 0
  %1010 = vmatpush.bf16.xpose.msra.mxu0 0
  %1011 = vmatpush.bf16.xpose.msra.mxu0 0
  %1012 = vmatpush.bf16.xpose.msra.mxu0 0
  %1013 = vmatpush.bf16.xpose.msra.mxu0 0
  %1014 = vmatpush.bf16.xpose.msra.mxu0 %v1005
  %1015 = vmatmul.bf16.gmra.mxu0 %v1002
  %v1016 = vpop.f32.mrf.mxu0
  %v1017 = vadd.f32 0.0, %v1016
  %v1018 = vpop.f32.mrf.mxu0
  %1019 = vdwg.mxu0
  %v1020 = vmul.f32 %v1017, 0.25
  %v1021 = vadd.f32 %v1020, %v366
  %v1022 = vsel %vm202, %v1021, -inf
  %1023 = vmax.xlane.f32.xlu0 %v1022
  %v1024 = vpop.xlane.xlu0 %1023
  %v1025 = vsub.f32 %v1021, %v1024
  %v1026 = vmul.f32 %v1025, 1.442695
  %v1027 = vpow.pop %v1026
  %v1028 = vsel %vm202, %v1027, 0.0
  %1029 = vadd.xlane.f32.xlu0 %v1028
  %v1030 = vpop.xlane.xlu0 %1029
  %v1031 = vrcp.pop %v1030
  %v1032 = vmul.f32 %v1027, %v1031
  %v1033 = vpack.c.bf16 %v1032, %v1032
  %1034 = vrot.lane.b32.xlu0 %v939, 48
  %v1035 = vpop.permute.xlu0 %1034
  %v1037 = vsel %vm202, %v1033, 0
  %v1040 = vsel %vm220, %v1035, 0
  %1042 = vmatpush.bf16.msra.mxu0 0
  %1043 = vmatpush.bf16.msra.mxu0 0
  %1044 = vmatpush.bf16.msra.mxu0 0
  %1045 = vmatpush.bf16.msra.mxu0 0
  %1046 = vmatpush.bf16.msra.mxu0 0
  %1047 = vmatpush.bf16.msra.mxu0 0
  %1048 = vmatpush.bf16.msra.mxu0 0
  %1049 = vmatpush.bf16.msra.mxu0 %v1040
  %1050 = vmatmul.bf16.gmra.mxu0 %v1037
  %v1051 = vpop.f32.mrf.mxu0
  %v1052 = vadd.f32 0.0, %v1051
  %v1053 = vpop.f32.mrf.mxu0
  %1054 = vdwg.mxu0
  %v1055 = vpack.c.bf16 %v1052, %v1052
  %v1057 = vsel %vm179, %v1055, 0
  %1059 = vmatpush.bf16.msra.mxu0 0
  %1060 = vmatpush.bf16.msra.mxu0 0
  %1061 = vmatpush.bf16.msra.mxu0 0
  %1062 = vmatpush.bf16.msra.mxu0 0
  %1063 = vmatpush.bf16.msra.mxu0 0
  %1064 = vmatpush.bf16.msra.mxu0 0
  %1065 = vmatpush.bf16.msra.mxu0 0
  %1066 = vmatpush.bf16.msra.mxu0 %v897
  %1067 = vmatmul.bf16.gmra.mxu0 %v1057
  %v1068 = vpop.f32.mrf.mxu0
  %v1069 = vadd.f32 0.0, %v1068
  %v1070 = vpop.f32.mrf.mxu0
  %1071 = vdwg.mxu0
  %v1073 = vsel %vm179, %v996, 0
  %1075 = vmatpush.bf16.msra.mxu0 0
  %1076 = vmatpush.bf16.msra.mxu0 0
  %1077 = vmatpush.bf16.msra.mxu0 0
  %1078 = vmatpush.bf16.msra.mxu0 0
  %1079 = vmatpush.bf16.msra.mxu0 0
  %1080 = vmatpush.bf16.msra.mxu0 0
  %1081 = vmatpush.bf16.msra.mxu0 0
  %1082 = vmatpush.bf16.msra.mxu0 %v919
  %1083 = vmatmul.bf16.gmra.mxu0 %v1073
  %v1084 = vpop.f32.mrf.mxu0
  %v1085 = vadd.f32 %v1069, %v1084
  %v1086 = vpop.f32.mrf.mxu0
  %1087 = vdwg.mxu0
  %v1089 = vperm.slane %v738, 0
  %v1091 = vadd.f32 %v934, %v1089
  %v1092 = vadd.f32 %v1085, %v1089
  %v1093 = vadd.f32 %v1091, %v723
  %v1094 = vadd.f32 %v1092, %v724
  %s1095 = scalar_lea.vmem %s8, 1
  %v1096 = vld [vmem:[%s1095] sm:$0x1]
  %s1097 = scalar_lea.vmem %s9, 1
  %v1098 = vld [vmem:[%s1097] sm:$0x1]
  %v1099 = vsel %vm64, %v1093, 0.0
  %1100 = vadd.xlane.f32.xlu0 %v1099
  %v1101 = vpop.xlane.xlu0 %1100
  %v1102 = vsel %vm64, %v1094, 0.0
  %1103 = vadd.xlane.f32.xlu0 %v1102
  %v1104 = vpop.xlane.xlu0 %1103
  %v1105 = vmul.f32 %v1101, %v77
  %v1106 = vmul.f32 %v1104, %v77
  %v1107 = vsub.f32 %v1093, %v1105
  %v1108 = vsub.f32 %v1094, %v1106
  %v1109 = vmul.f32 %v1107, %v1107
  %v1110 = vmul.f32 %v1108, %v1108
  %v1111 = vsel %vm64, %v1109, 0.0
  %1112 = vadd.xlane.f32.xlu0 %v1111
  %v1113 = vpop.xlane.xlu0 %1112
  %v1114 = vsel %vm64, %v1110, 0.0
  %1115 = vadd.xlane.f32.xlu0 %v1114
  %v1116 = vpop.xlane.xlu0 %1115
  %v1117 = vmul.f32 %v1113, %v77
  %v1118 = vmul.f32 %v1116, %v77
  %v1119 = vadd.f32 %v1117, 1e-12
  %v1120 = vadd.f32 %v1118, 1e-12
  %v1121 = vrsqrt.pop %v1119
  %v1122 = vmul.f32 %v1121, %v1119
  %v1123 = vmul.f32 %v1122, %v1121
  %v1124 = vmul.f32 0.5, %v1123
  %v1125 = vsub.f32 1.5, %v1124
  %v1126 = vmul.f32 %v1121, %v1125
  %vm1127 = vweird.f32 %v1119
  %vm1128 = vweird.f32 %v1121
  %vm1129 = vmor %vm1127, %vm1128
  %v1130 = vsel %vm1129, %v1121, %v1126
  %v1131 = vrsqrt.pop %v1120
  %v1132 = vmul.f32 %v1131, %v1120
  %v1133 = vmul.f32 %v1132, %v1131
  %v1134 = vmul.f32 0.5, %v1133
  %v1135 = vsub.f32 1.5, %v1134
  %v1136 = vmul.f32 %v1131, %v1135
  %vm1137 = vweird.f32 %v1120
  %vm1138 = vweird.f32 %v1131
  %vm1139 = vmor %vm1137, %vm1138
  %v1140 = vsel %vm1139, %v1131, %v1136
  %v1141 = vmul.f32 %v1107, %v1130
  %v1142 = vmul.f32 %v1108, %v1140
  %v1144 = vperm.slane %v1096, 0
  %v1146 = vmul.f32 %v1141, %v1144
  %v1147 = vmul.f32 %v1142, %v1144
  %v1149 = vperm.slane %v1098, 0
  %v1151 = vadd.f32 %v1146, %v1149
  %v1152 = vadd.f32 %v1147, %v1149
  %v1153 = vpack.c.bf16 %v1152, %v1151
  %s1154 = scalar_lea.vmem %s10, 16
  %v1155 = vld [vmem:[%s1154] sm:$0xf]
  %v1156 = vld [vmem:[%s1154 + $0x4] sm:$0xf]
  %v1157 = vld [vmem:[%s1154 + $0x8] sm:$0xf]
  %v1158 = vld [vmem:[%s1154 + $0xc] sm:$0xf]
  %s1159 = scalar_lea.vmem %s11, 1
  %v1160 = vld [vmem:[%s1159] sm:$0x1]
  %v1162 = vperm.slane %v1160, 0
  %v1168 = vunpack.c.l.b16 %v1155
  %v1169 = vunpack.c.l.b16 %v1156
  %v1170 = vunpack.c.l.b16 %v1157
  %v1171 = vunpack.c.l.b16 %v1158
  %v1172 = vpack.c.b16 %v1169, %v1168
  %v1173 = vpack.c.b16 %v1171, %v1170
  %v1177 = vsel %vm64, %v1153, 0
  %1179 = vmatpush.bf16.msra.mxu0 0
  %1180 = vmatpush.bf16.msra.mxu0 0
  %1181 = vmatpush.bf16.msra.mxu0 0
  %1182 = vmatpush.bf16.msra.mxu0 0
  %1183 = vmatpush.bf16.msra.mxu0 0
  %1184 = vmatpush.bf16.msra.mxu0 0
  %1185 = vmatpush.bf16.msra.mxu0 %v1173
  %1186 = vmatpush.bf16.msra.mxu0 %v1172
  %1187 = vmatmul.bf16.gmra.mxu0 %v1177
  %v1188 = vpop.f32.mrf.mxu0
  %v1189 = vadd.f32 %v1162, %v1188
  %v1190 = vpop.f32.mrf.mxu0
  %v1191 = vadd.f32 %v1162, %v1190
  %1192 = vdwg.mxu0
  %v1193 = vmul.f32 %v1189, 0.5
  %v1194 = vmul.f32 %v1191, 0.5
  %v1195 = vmul.f32 %v1189, 0.044715
  %v1196 = vmul.f32 %v1191, 0.044715
  %v1197 = vmul.f32 %v1195, %v1189
  %v1198 = vmul.f32 %v1196, %v1191
  %v1199 = vmul.f32 %v1197, %v1189
  %v1200 = vmul.f32 %v1198, %v1191
  %v1201 = vadd.f32 %v1189, %v1199
  %v1202 = vadd.f32 %v1191, %v1200
  %v1203 = vmul.f32 %v1201, 0.7978846
  %v1204 = vmul.f32 %v1202, 0.7978846
  %v1205 = vtanh.pop %v1203
  %v1206 = vtanh.pop %v1204
  %v1207 = vadd.f32 %v1205, 1.0
  %v1208 = vadd.f32 %v1206, 1.0
  %v1209 = vmul.f32 %v1193, %v1207
  %v1210 = vmul.f32 %v1194, %v1208
  %v1211 = vpack.c.bf16 %v1210, %v1209
  %s1212 = scalar_lea.vmem %s12, 32
  %v1213 = vld [vmem:[%s1212] sm:$0xf]
  %v1214 = vld [vmem:[%s1212 + $0x4] sm:$0xf]
  %v1215 = vld [vmem:[%s1212 + $0x8] sm:$0xf]
  %v1216 = vld [vmem:[%s1212 + $0xc] sm:$0xf]
  %v1217 = vld [vmem:[%s1212 + $0x10] sm:$0xf]
  %v1218 = vld [vmem:[%s1212 + $0x14] sm:$0xf]
  %v1219 = vld [vmem:[%s1212 + $0x18] sm:$0xf]
  %v1220 = vld [vmem:[%s1212 + $0x1c] sm:$0xf]
  %s1221 = scalar_lea.vmem %s13, 1
  %v1222 = vld [vmem:[%s1221] sm:$0x1]
  %v1224 = vperm.slane %v1222, 0
  %v1234 = vunpack.c.l.b16 %v1213
  %v1235 = vunpack.c.l.b16 %v1214
  %v1236 = vunpack.c.l.b16 %v1215
  %v1237 = vunpack.c.l.b16 %v1216
  %v1238 = vunpack.c.l.b16 %v1217
  %v1239 = vunpack.c.l.b16 %v1218
  %v1240 = vunpack.c.l.b16 %v1219
  %v1241 = vunpack.c.l.b16 %v1220
  %v1242 = vpack.c.b16 %v1235, %v1234
  %v1243 = vpack.c.b16 %v1237, %v1236
  %v1244 = vpack.c.b16 %v1239, %v1238
  %v1245 = vpack.c.b16 %v1241, %v1240
  %v1251 = vsel %vm649, %v1211, 0
  %1253 = vmatpush.bf16.msra.mxu0 0
  %1254 = vmatpush.bf16.msra.mxu0 0
  %1255 = vmatpush.bf16.msra.mxu0 0
  %1256 = vmatpush.bf16.msra.mxu0 0
  %1257 = vmatpush.bf16.msra.mxu0 %v1245
  %1258 = vmatpush.bf16.msra.mxu0 %v1244
  %1259 = vmatpush.bf16.msra.mxu0 %v1243
  %1260 = vmatpush.bf16.msra.mxu0 %v1242
  %1261 = vmatmul.bf16.gmra.mxu0 %v1251
  %v1262 = vpop.f32.mrf.mxu0
  %v1263 = vadd.f32 %v1224, %v1262
  %v1264 = vpop.f32.mrf.mxu0
  %v1265 = vadd.f32 %v1224, %v1264
  %1266 = vdwg.mxu0
  %v1267 = vadd.f32 %v1263, %v1151
  %v1268 = vadd.f32 %v1265, %v1152
  %s1269 = scalar_lea.vmem %s14, 1
  %v1270 = vld [vmem:[%s1269] sm:$0x1]
  %s1271 = scalar_lea.vmem %s15, 1
  %v1272 = vld [vmem:[%s1271] sm:$0x1]
  %v1273 = vsel %vm64, %v1267, 0.0
  %1274 = vadd.xlane.f32.xlu0 %v1273
  %v1275 = vpop.xlane.xlu0 %1274
  %v1276 = vsel %vm64, %v1268, 0.0
  %1277 = vadd.xlane.f32.xlu0 %v1276
  %v1278 = vpop.xlane.xlu0 %1277
  %v1279 = vmul.f32 %v1275, %v77
  %v1280 = vmul.f32 %v1278, %v77
  %v1281 = vsub.f32 %v1267, %v1279
  %v1282 = vsub.f32 %v1268, %v1280
  %v1283 = vmul.f32 %v1281, %v1281
  %v1284 = vmul.f32 %v1282, %v1282
  %v1285 = vsel %vm64, %v1283, 0.0
  %1286 = vadd.xlane.f32.xlu0 %v1285
  %v1287 = vpop.xlane.xlu0 %1286
  %v1288 = vsel %vm64, %v1284, 0.0
  %1289 = vadd.xlane.f32.xlu0 %v1288
  %v1290 = vpop.xlane.xlu0 %1289
  %v1291 = vmul.f32 %v1287, %v77
  %v1292 = vmul.f32 %v1290, %v77
  %v1293 = vadd.f32 %v1291, 1e-12
  %v1294 = vadd.f32 %v1292, 1e-12
  %v1295 = vrsqrt.pop %v1293
  %v1296 = vmul.f32 %v1295, %v1293
  %v1297 = vmul.f32 %v1296, %v1295
  %v1298 = vmul.f32 0.5, %v1297
  %v1299 = vsub.f32 1.5, %v1298
  %v1300 = vmul.f32 %v1295, %v1299
  %vm1301 = vweird.f32 %v1293
  %vm1302 = vweird.f32 %v1295
  %vm1303 = vmor %vm1301, %vm1302
  %v1304 = vsel %vm1303, %v1295, %v1300
  %v1305 = vrsqrt.pop %v1294
  %v1306 = vmul.f32 %v1305, %v1294
  %v1307 = vmul.f32 %v1306, %v1305
  %v1308 = vmul.f32 0.5, %v1307
  %v1309 = vsub.f32 1.5, %v1308
  %v1310 = vmul.f32 %v1305, %v1309
  %vm1311 = vweird.f32 %v1294
  %vm1312 = vweird.f32 %v1305
  %vm1313 = vmor %vm1311, %vm1312
  %v1314 = vsel %vm1313, %v1305, %v1310
  %v1315 = vmul.f32 %v1281, %v1304
  %v1316 = vmul.f32 %v1282, %v1314
  %v1318 = vperm.slane %v1270, 0
  %v1320 = vmul.f32 %v1315, %v1318
  %v1321 = vmul.f32 %v1316, %v1318
  %v1323 = vperm.slane %v1272, 0
  %v1325 = vadd.f32 %v1320, %v1323
  %v1326 = vadd.f32 %v1321, %v1323
  %v1328 = vrot.slane %v1326, 7
  %vm1330 = vcmask 1040384
  %v1331 = vsel %vm1330, %v1325, %v1328
  %v1332 = vpack.c.bf16 %v1331, %v1331
  %v1333 = vld [vmem:[%s16] sm:$0xf]
  %v1334 = vld [vmem:[%s16 + $0x4] sm:$0xf]
  %v1335 = vld [vmem:[%s16 + $0x8] sm:$0xf]
  %v1336 = vld [vmem:[%s16 + $0xc] sm:$0xf]
  %v1337 = vld [vmem:[%s17] sm:$0x1]
  %v1339 = vperm.slane %v1337, 0
  %v1345 = vunpack.c.l.b16 %v1333
  %v1346 = vunpack.c.l.b16 %v1334
  %v1347 = vunpack.c.l.b16 %v1335
  %v1348 = vunpack.c.l.b16 %v1336
  %v1349 = vpack.c.b16 %v1346, %v1345
  %v1350 = vpack.c.b16 %v1348, %v1347
  %v1354 = vsel %vm64, %v1332, 0
  %1356 = vmatpush.bf16.msra.mxu0 0
  %1357 = vmatpush.bf16.msra.mxu0 0
  %1358 = vmatpush.bf16.msra.mxu0 0
  %1359 = vmatpush.bf16.msra.mxu0 0
  %1360 = vmatpush.bf16.msra.mxu0 0
  %1361 = vmatpush.bf16.msra.mxu0 0
  %1362 = vmatpush.bf16.msra.mxu0 %v1350
  %1363 = vmatpush.bf16.msra.mxu0 %v1349
  %1364 = vmatmul.bf16.gmra.mxu0 %v1354
  %v1365 = vpop.f32.mrf.mxu0
  %v1366 = vadd.f32 %v1339, %v1365
  %v1367 = vpop.f32.mrf.mxu0
  %1368 = vdwg.mxu0
  %1369 = vst [vmem:[%s18] sm:$0x3] %v1366
  // Predicated region
  $region74: #{model_forward.1} parent=0 // pred_check
    _
  $region75: #{model_forward.1} parent=0 // pred_check_branch
    %1371 = sbr.rel (0) target = $region77
  $region76: #{model_forward.1} parent=0 // pred_region
    _
  $region77: #{model_forward.1} parent=0 // pred_fallthru
    _
  // Predicated region
  $region78: #{model_forward.1} parent=0 // pred_check
    _
  $region79: #{model_forward.1} parent=0 // pred_check_branch
    %1373 = sbr.rel (0) target = $region81
  $region80: #{model_forward.1} parent=0 // pred_region
    _
  $region81: #{model_forward.1} parent=0 // pred_fallthru
    _

</llo_original>
